<compile_context>
chip_gen: v7x
topology: tpu7x:2x2x1
jax: 0.10.0
libtpu: 0.0.40
codegen_flags: <defaults>
</compile_context>

<pallas_src>
import math
import jax
import jax.numpy as jnp
from jax import lax
from jax.experimental import pallas as pl
from jax.experimental.pallas import tpu as pltpu


def _make_fused_kernel(N, Cin, Cout, H, W, kh, kw, eps,
                       use_batchnorm, use_bias, activation):
    Ho, Wo = H - kh + 1, W - kw + 1
    HoW = Ho * W                 # padded output row length (last W-Wo cols of each row are garbage)
    M_valid = N * Ho * Wo        # number of real output pixels (BN population size)

    def apply_act(y):
        if activation == "relu":
            return jnp.maximum(y, 0.0)
        if activation == "leakyrelu":
            return jnp.where(y >= 0, y, 0.1 * y)
        if activation == "elu":
            return jnp.where(y >= 0, y, jnp.expm1(y))
        # TODO(synk): 'prelu' needs a learned slope parameter; not wired here.
        return y

    def kernel(x_ref, w_ref, mask_ref, *refs):
        # refs: (gamma_ref, beta_ref, o_ref) if use_batchnorm
        #       (bias_ref, o_ref)            if plain conv(+act) with bias
        #       (o_ref,)                     otherwise
        if use_batchnorm:
            gamma_ref, beta_ref, o_ref = refs
        elif use_bias:
            bias_ref, o_ref = refs
        else:
            (o_ref,) = refs

        # ---- conv as kh*kw shifted GEMMs (im2col fused in-kernel) ----
        # x_ref[n] is (Cin, H*W + kw - 1); a window starting at i*W + j of length Ho*W
        # contains x[n, c, y+i, x+j] at flat position y*W + x (valid for x < Wo).
        per_n = []
        for n in range(N):
            xn = x_ref[n]                                   # (Cin, H*W + kw - 1)
            acc = jnp.zeros((Cout, HoW), jnp.float32)
            for i in range(kh):
                for j in range(kw):
                    start = i * W + j
                    rhs = xn[:, start:start + HoW]          # (Cin, Ho*W), lane-dense
                    acc = acc + jnp.dot(w_ref[i * kw + j], rhs,
                                        preferred_element_type=jnp.float32)
            per_n.append(acc)

        if use_batchnorm:
            # One-pass, per-channel training-mode batch stats over the VALID pixels only.
            # (Conv bias is NOT added: it is exactly cancelled by the mean subtraction.)
            mask = mask_ref[...]                            # (1, Ho*W) in {0, 1}
            s1 = jnp.zeros((Cout, 1), jnp.float32)
            s2 = jnp.zeros((Cout, 1), jnp.float32)
            for n in range(N):
                ym = per_n[n] * mask
                s1 = s1 + jnp.sum(ym, axis=1, keepdims=True)
                s2 = s2 + jnp.sum(per_n[n] * ym, axis=1, keepdims=True)
            inv_m = 1.0 / M_valid
            mean = s1 * inv_m
            var = s2 * inv_m - mean * mean                  # biased var (PyTorch training BN)
            scale = gamma_ref[...] * lax.rsqrt(var + eps)   # (Cout, 1)
            shift = beta_ref[...] - mean * scale            # (Cout, 1)

        for n in range(N):
            y = per_n[n]
            if use_batchnorm:
                y = y * scale + shift                       # folded normalize + affine
            elif use_bias:
                y = y + bias_ref[...]
            y = apply_act(y)
            o_ref[n] = y.astype(o_ref.dtype)

    return kernel


def conv2d_wrapper_forward(x, weight, bias, gamma, beta,
                           normalization="batch", activation="relu", eps=1e-5):
    """Forward pass of Conv2d_wrapper (stride 1, padding 0).

    x:      (N, Cin, H, W)  NCHW
    weight: (Cout, Cin, kh, kw)
    bias:   (Cout,)             (ignored with batch norm: cancelled by mean subtraction)
    gamma/beta: (Cout,)         batch-norm affine parameters
    returns (N, Cout, H-kh+1, W-kw+1) NCHW.
    """
    N, Cin, H, W = x.shape
    Cout, _, kh, kw = weight.shape
    Ho, Wo = H - kh + 1, W - kw + 1
    HoW = Ho * W

    if normalization == "instance":
        # TODO(synk): InstanceNorm2d path not implemented in the Pallas kernel.
        raise NotImplementedError("instance norm not supported")

    use_batchnorm = (normalization == "batch")
    use_bias = (bias is not None) and (not use_batchnorm)

    x = x.astype(jnp.float32)
    # Flatten spatial dims and pad kw-1 zero lanes so every shifted window slice is in-bounds.
    x_flat = jnp.pad(x.reshape(N, Cin, H * W), ((0, 0), (0, 0), (0, kw - 1)))

    # weight[:, :, i, j] -> wk[i*kw + j] with shape (Cout, Cin)
    wk = weight.astype(jnp.float32).transpose(2, 3, 0, 1).reshape(kh * kw, Cout, Cin)

    # Validity mask over the flattened (Ho, W) output rows (last W-Wo columns of each
    # row are wrap-around garbage and must be excluded from the BN statistics).
    col = jnp.arange(HoW, dtype=jnp.int32) % W
    mask = (col < Wo).astype(jnp.float32).reshape(1, HoW)

    inputs = [x_flat, wk, mask]
    if use_batchnorm:
        inputs += [gamma.astype(jnp.float32).reshape(Cout, 1),
                   beta.astype(jnp.float32).reshape(Cout, 1)]
    elif use_bias:
        inputs += [bias.astype(jnp.float32).reshape(Cout, 1)]

    kernel = _make_fused_kernel(N, Cin, Cout, H, W, kh, kw, eps,
                                use_batchnorm, use_bias, activation)

    vmem = pltpu.MemorySpace.VMEM
    out = pl.pallas_call(
        kernel,
        out_shape=jax.ShapeDtypeStruct((N, Cout, HoW), jnp.float32),
        in_specs=[pl.BlockSpec(memory_space=vmem)] * len(inputs),
        out_specs=pl.BlockSpec(memory_space=vmem),
    )(*inputs)

    # (N, Cout, Ho*W) -> (N, Cout, Ho, W) -> crop padded columns. Already channel-major
    # (NCHW); no minor-dim transpose needed.
    return out.reshape(N, Cout, Ho, W)[:, :, :, :Wo]


def _reference_forward(x, weight, bias, gamma, beta, eps=1e-5):
    # pure-JAX reference: conv + training-mode batchnorm + relu
    y = lax.conv_general_dilated(
        x, weight, window_strides=(1, 1), padding="VALID",
        dimension_numbers=("NCHW", "OIHW", "NCHW"))
    y = y + bias.reshape(1, -1, 1, 1)
    mean = jnp.mean(y, axis=(0, 2, 3), keepdims=True)
    var = jnp.mean((y - mean) ** 2, axis=(0, 2, 3), keepdims=True)
    y = (y - mean) * lax.rsqrt(var + eps)
    y = y * gamma.reshape(1, -1, 1, 1) + beta.reshape(1, -1, 1, 1)
    return jnp.maximum(y, 0.0)


if __name__ == "__main__":
    # Conv2d_wrapper(4, 8, 3, normalization='batch', activation='relu')
    N, Cin, H, W = 2, 4, 16, 16
    Cout, kh, kw = 8, 3, 3

    key = jax.random.PRNGKey(0)
    kx, kw_key = jax.random.split(key)

    x = jax.random.normal(kx, (N, Cin, H, W), dtype=jnp.float32)

    # weight_init(): conv weight ~ N(0, sqrt(2/n)), n = kh*kw*Cin; conv bias = 0
    n_fan = kh * kw * Cin
    weight = jax.random.normal(kw_key, (Cout, Cin, kh, kw), dtype=jnp.float32) \
        * math.sqrt(2.0 / n_fan)
    bias = jnp.zeros((Cout,), dtype=jnp.float32)
    # BatchNorm affine params: gamma = 1, beta = 0
    gamma = jnp.ones((Cout,), dtype=jnp.float32)
    beta = jnp.zeros((Cout,), dtype=jnp.float32)

    out = conv2d_wrapper_forward(x, weight, bias, gamma, beta,
                                 normalization="batch", activation="relu")
    out = jax.block_until_ready(out)

    ref = _reference_forward(x, weight, bias, gamma, beta)
    assert out.shape == (N, Cout, H - kh + 1, W - kw + 1)
    assert jnp.allclose(out, ref, atol=2e-4, rtol=2e-4), \
        float(jnp.max(jnp.abs(out - ref)))

    print("KERNEL_OK")
</pallas_src>

<mosaic_0001>
module attributes {stable_mosaic.version = 11 : i64} {
  func.func @kernel(%arg0: memref<2x4x258xf32, #tpu.memory_space<vmem>>, %arg1: memref<9x8x4xf32, #tpu.memory_space<vmem>>, %arg2: memref<1x224xf32, #tpu.memory_space<vmem>>, %arg3: memref<8x1xf32, #tpu.memory_space<vmem>>, %arg4: memref<8x1xf32, #tpu.memory_space<vmem>>, %arg5: memref<2x8x224xf32, #tpu.memory_space<vmem>>) attributes {dimension_semantics = [], scalar_prefetch = 0 : i64, scratch_operands = 0 : i64, tpu.core_type = #tpu.core_type<tc>} {
    %c0 = arith.constant 0 : index
    %c0_0 = arith.constant 0 : index
    %c0_1 = arith.constant 0 : index
    %0 = vector.load %arg0[%c0, %c0_0, %c0_1] : memref<2x4x258xf32, #tpu.memory_space<vmem>>, vector<1x4x258xf32>
    %1 = vector.shape_cast %0 : vector<1x4x258xf32> to vector<4x258xf32>
    %cst = arith.constant 0.000000e+00 : f32
    %2 = vector.broadcast %cst : f32 to vector<8x224xf32>
    %3 = vector.extract_strided_slice %1 {offsets = [0, 0], sizes = [4, 224], strides = [1, 1]} : vector<4x258xf32> to vector<4x224xf32>
    %c0_2 = arith.constant 0 : index
    %c0_3 = arith.constant 0 : index
    %c0_4 = arith.constant 0 : index
    %4 = vector.load %arg1[%c0_2, %c0_3, %c0_4] : memref<9x8x4xf32, #tpu.memory_space<vmem>>, vector<1x8x4xf32>
    %5 = vector.shape_cast %4 : vector<1x8x4xf32> to vector<8x4xf32>
    %cst_5 = arith.constant dense<0.000000e+00> : vector<8x224xf32>
    %6 = tpu.matmul %5, %3, %cst_5 {dimension_numbers = #tpu.dot_dimension_numbers<[1], [0], [0], [1], [0, 0, 1, 1], [], []>} : vector<8x4xf32>, vector<4x224xf32>, vector<8x224xf32> -> vector<8x224xf32>
    %7 = arith.addf %2, %6 : vector<8x224xf32>
    %8 = vector.extract_strided_slice %1 {offsets = [0, 1], sizes = [4, 224], strides = [1, 1]} : vector<4x258xf32> to vector<4x224xf32>
    %c1 = arith.constant 1 : index
    %c0_6 = arith.constant 0 : index
    %c0_7 = arith.constant 0 : index
    %9 = vector.load %arg1[%c1, %c0_6, %c0_7] : memref<9x8x4xf32, #tpu.memory_space<vmem>>, vector<1x8x4xf32>
    %10 = vector.shape_cast %9 : vector<1x8x4xf32> to vector<8x4xf32>
    %cst_8 = arith.constant dense<0.000000e+00> : vector<8x224xf32>
    %11 = tpu.matmul %10, %8, %cst_8 {dimension_numbers = #tpu.dot_dimension_numbers<[1], [0], [0], [1], [0, 0, 1, 1], [], []>} : vector<8x4xf32>, vector<4x224xf32>, vector<8x224xf32> -> vector<8x224xf32>
    %12 = arith.addf %7, %11 : vector<8x224xf32>
    %13 = vector.extract_strided_slice %1 {offsets = [0, 2], sizes = [4, 224], strides = [1, 1]} : vector<4x258xf32> to vector<4x224xf32>
    %c2 = arith.constant 2 : index
    %c0_9 = arith.constant 0 : index
    %c0_10 = arith.constant 0 : index
    %14 = vector.load %arg1[%c2, %c0_9, %c0_10] : memref<9x8x4xf32, #tpu.memory_space<vmem>>, vector<1x8x4xf32>
    %15 = vector.shape_cast %14 : vector<1x8x4xf32> to vector<8x4xf32>
    %cst_11 = arith.constant dense<0.000000e+00> : vector<8x224xf32>
    %16 = tpu.matmul %15, %13, %cst_11 {dimension_numbers = #tpu.dot_dimension_numbers<[1], [0], [0], [1], [0, 0, 1, 1], [], []>} : vector<8x4xf32>, vector<4x224xf32>, vector<8x224xf32> -> vector<8x224xf32>
    %17 = arith.addf %12, %16 : vector<8x224xf32>
    %18 = vector.extract_strided_slice %1 {offsets = [0, 16], sizes = [4, 224], strides = [1, 1]} : vector<4x258xf32> to vector<4x224xf32>
    %c3 = arith.constant 3 : index
    %c0_12 = arith.constant 0 : index
    %c0_13 = arith.constant 0 : index
    %19 = vector.load %arg1[%c3, %c0_12, %c0_13] : memref<9x8x4xf32, #tpu.memory_space<vmem>>, vector<1x8x4xf32>
    %20 = vector.shape_cast %19 : vector<1x8x4xf32> to vector<8x4xf32>
    %cst_14 = arith.constant dense<0.000000e+00> : vector<8x224xf32>
    %21 = tpu.matmul %20, %18, %cst_14 {dimension_numbers = #tpu.dot_dimension_numbers<[1], [0], [0], [1], [0, 0, 1, 1], [], []>} : vector<8x4xf32>, vector<4x224xf32>, vector<8x224xf32> -> vector<8x224xf32>
    %22 = arith.addf %17, %21 : vector<8x224xf32>
    %23 = vector.extract_strided_slice %1 {offsets = [0, 17], sizes = [4, 224], strides = [1, 1]} : vector<4x258xf32> to vector<4x224xf32>
    %c4 = arith.constant 4 : index
    %c0_15 = arith.constant 0 : index
    %c0_16 = arith.constant 0 : index
    %24 = vector.load %arg1[%c4, %c0_15, %c0_16] : memref<9x8x4xf32, #tpu.memory_space<vmem>>, vector<1x8x4xf32>
    %25 = vector.shape_cast %24 : vector<1x8x4xf32> to vector<8x4xf32>
    %cst_17 = arith.constant dense<0.000000e+00> : vector<8x224xf32>
    %26 = tpu.matmul %25, %23, %cst_17 {dimension_numbers = #tpu.dot_dimension_numbers<[1], [0], [0], [1], [0, 0, 1, 1], [], []>} : vector<8x4xf32>, vector<4x224xf32>, vector<8x224xf32> -> vector<8x224xf32>
    %27 = arith.addf %22, %26 : vector<8x224xf32>
    %28 = vector.extract_strided_slice %1 {offsets = [0, 18], sizes = [4, 224], strides = [1, 1]} : vector<4x258xf32> to vector<4x224xf32>
    %c5 = arith.constant 5 : index
    %c0_18 = arith.constant 0 : index
    %c0_19 = arith.constant 0 : index
    %29 = vector.load %arg1[%c5, %c0_18, %c0_19] : memref<9x8x4xf32, #tpu.memory_space<vmem>>, vector<1x8x4xf32>
    %30 = vector.shape_cast %29 : vector<1x8x4xf32> to vector<8x4xf32>
    %cst_20 = arith.constant dense<0.000000e+00> : vector<8x224xf32>
    %31 = tpu.matmul %30, %28, %cst_20 {dimension_numbers = #tpu.dot_dimension_numbers<[1], [0], [0], [1], [0, 0, 1, 1], [], []>} : vector<8x4xf32>, vector<4x224xf32>, vector<8x224xf32> -> vector<8x224xf32>
    %32 = arith.addf %27, %31 : vector<8x224xf32>
    %33 = vector.extract_strided_slice %1 {offsets = [0, 32], sizes = [4, 224], strides = [1, 1]} : vector<4x258xf32> to vector<4x224xf32>
    %c6 = arith.constant 6 : index
    %c0_21 = arith.constant 0 : index
    %c0_22 = arith.constant 0 : index
    %34 = vector.load %arg1[%c6, %c0_21, %c0_22] : memref<9x8x4xf32, #tpu.memory_space<vmem>>, vector<1x8x4xf32>
    %35 = vector.shape_cast %34 : vector<1x8x4xf32> to vector<8x4xf32>
    %cst_23 = arith.constant dense<0.000000e+00> : vector<8x224xf32>
    %36 = tpu.matmul %35, %33, %cst_23 {dimension_numbers = #tpu.dot_dimension_numbers<[1], [0], [0], [1], [0, 0, 1, 1], [], []>} : vector<8x4xf32>, vector<4x224xf32>, vector<8x224xf32> -> vector<8x224xf32>
    %37 = arith.addf %32, %36 : vector<8x224xf32>
    %38 = vector.extract_strided_slice %1 {offsets = [0, 33], sizes = [4, 224], strides = [1, 1]} : vector<4x258xf32> to vector<4x224xf32>
    %c7 = arith.constant 7 : index
    %c0_24 = arith.constant 0 : index
    %c0_25 = arith.constant 0 : index
    %39 = vector.load %arg1[%c7, %c0_24, %c0_25] : memref<9x8x4xf32, #tpu.memory_space<vmem>>, vector<1x8x4xf32>
    %40 = vector.shape_cast %39 : vector<1x8x4xf32> to vector<8x4xf32>
    %cst_26 = arith.constant dense<0.000000e+00> : vector<8x224xf32>
    %41 = tpu.matmul %40, %38, %cst_26 {dimension_numbers = #tpu.dot_dimension_numbers<[1], [0], [0], [1], [0, 0, 1, 1], [], []>} : vector<8x4xf32>, vector<4x224xf32>, vector<8x224xf32> -> vector<8x224xf32>
    %42 = arith.addf %37, %41 : vector<8x224xf32>
    %43 = vector.extract_strided_slice %1 {offsets = [0, 34], sizes = [4, 224], strides = [1, 1]} : vector<4x258xf32> to vector<4x224xf32>
    %c8 = arith.constant 8 : index
    %c0_27 = arith.constant 0 : index
    %c0_28 = arith.constant 0 : index
    %44 = vector.load %arg1[%c8, %c0_27, %c0_28] : memref<9x8x4xf32, #tpu.memory_space<vmem>>, vector<1x8x4xf32>
    %45 = vector.shape_cast %44 : vector<1x8x4xf32> to vector<8x4xf32>
    %cst_29 = arith.constant dense<0.000000e+00> : vector<8x224xf32>
    %46 = tpu.matmul %45, %43, %cst_29 {dimension_numbers = #tpu.dot_dimension_numbers<[1], [0], [0], [1], [0, 0, 1, 1], [], []>} : vector<8x4xf32>, vector<4x224xf32>, vector<8x224xf32> -> vector<8x224xf32>
    %47 = arith.addf %42, %46 : vector<8x224xf32>
    %c1_30 = arith.constant 1 : index
    %c0_31 = arith.constant 0 : index
    %c0_32 = arith.constant 0 : index
    %48 = vector.load %arg0[%c1_30, %c0_31, %c0_32] : memref<2x4x258xf32, #tpu.memory_space<vmem>>, vector<1x4x258xf32>
    %49 = vector.shape_cast %48 : vector<1x4x258xf32> to vector<4x258xf32>
    %cst_33 = arith.constant 0.000000e+00 : f32
    %50 = vector.broadcast %cst_33 : f32 to vector<8x224xf32>
    %51 = vector.extract_strided_slice %49 {offsets = [0, 0], sizes = [4, 224], strides = [1, 1]} : vector<4x258xf32> to vector<4x224xf32>
    %c0_34 = arith.constant 0 : index
    %c0_35 = arith.constant 0 : index
    %c0_36 = arith.constant 0 : index
    %52 = vector.load %arg1[%c0_34, %c0_35, %c0_36] : memref<9x8x4xf32, #tpu.memory_space<vmem>>, vector<1x8x4xf32>
    %53 = vector.shape_cast %52 : vector<1x8x4xf32> to vector<8x4xf32>
    %cst_37 = arith.constant dense<0.000000e+00> : vector<8x224xf32>
    %54 = tpu.matmul %53, %51, %cst_37 {dimension_numbers = #tpu.dot_dimension_numbers<[1], [0], [0], [1], [0, 0, 1, 1], [], []>} : vector<8x4xf32>, vector<4x224xf32>, vector<8x224xf32> -> vector<8x224xf32>
    %55 = arith.addf %50, %54 : vector<8x224xf32>
    %56 = vector.extract_strided_slice %49 {offsets = [0, 1], sizes = [4, 224], strides = [1, 1]} : vector<4x258xf32> to vector<4x224xf32>
    %c1_38 = arith.constant 1 : index
    %c0_39 = arith.constant 0 : index
    %c0_40 = arith.constant 0 : index
    %57 = vector.load %arg1[%c1_38, %c0_39, %c0_40] : memref<9x8x4xf32, #tpu.memory_space<vmem>>, vector<1x8x4xf32>
    %58 = vector.shape_cast %57 : vector<1x8x4xf32> to vector<8x4xf32>
    %cst_41 = arith.constant dense<0.000000e+00> : vector<8x224xf32>
    %59 = tpu.matmul %58, %56, %cst_41 {dimension_numbers = #tpu.dot_dimension_numbers<[1], [0], [0], [1], [0, 0, 1, 1], [], []>} : vector<8x4xf32>, vector<4x224xf32>, vector<8x224xf32> -> vector<8x224xf32>
    %60 = arith.addf %55, %59 : vector<8x224xf32>
    %61 = vector.extract_strided_slice %49 {offsets = [0, 2], sizes = [4, 224], strides = [1, 1]} : vector<4x258xf32> to vector<4x224xf32>
    %c2_42 = arith.constant 2 : index
    %c0_43 = arith.constant 0 : index
    %c0_44 = arith.constant 0 : index
    %62 = vector.load %arg1[%c2_42, %c0_43, %c0_44] : memref<9x8x4xf32, #tpu.memory_space<vmem>>, vector<1x8x4xf32>
    %63 = vector.shape_cast %62 : vector<1x8x4xf32> to vector<8x4xf32>
    %cst_45 = arith.constant dense<0.000000e+00> : vector<8x224xf32>
    %64 = tpu.matmul %63, %61, %cst_45 {dimension_numbers = #tpu.dot_dimension_numbers<[1], [0], [0], [1], [0, 0, 1, 1], [], []>} : vector<8x4xf32>, vector<4x224xf32>, vector<8x224xf32> -> vector<8x224xf32>
    %65 = arith.addf %60, %64 : vector<8x224xf32>
    %66 = vector.extract_strided_slice %49 {offsets = [0, 16], sizes = [4, 224], strides = [1, 1]} : vector<4x258xf32> to vector<4x224xf32>
    %c3_46 = arith.constant 3 : index
    %c0_47 = arith.constant 0 : index
    %c0_48 = arith.constant 0 : index
    %67 = vector.load %arg1[%c3_46, %c0_47, %c0_48] : memref<9x8x4xf32, #tpu.memory_space<vmem>>, vector<1x8x4xf32>
    %68 = vector.shape_cast %67 : vector<1x8x4xf32> to vector<8x4xf32>
    %cst_49 = arith.constant dense<0.000000e+00> : vector<8x224xf32>
    %69 = tpu.matmul %68, %66, %cst_49 {dimension_numbers = #tpu.dot_dimension_numbers<[1], [0], [0], [1], [0, 0, 1, 1], [], []>} : vector<8x4xf32>, vector<4x224xf32>, vector<8x224xf32> -> vector<8x224xf32>
    %70 = arith.addf %65, %69 : vector<8x224xf32>
    %71 = vector.extract_strided_slice %49 {offsets = [0, 17], sizes = [4, 224], strides = [1, 1]} : vector<4x258xf32> to vector<4x224xf32>
    %c4_50 = arith.constant 4 : index
    %c0_51 = arith.constant 0 : index
    %c0_52 = arith.constant 0 : index
    %72 = vector.load %arg1[%c4_50, %c0_51, %c0_52] : memref<9x8x4xf32, #tpu.memory_space<vmem>>, vector<1x8x4xf32>
    %73 = vector.shape_cast %72 : vector<1x8x4xf32> to vector<8x4xf32>
    %cst_53 = arith.constant dense<0.000000e+00> : vector<8x224xf32>
    %74 = tpu.matmul %73, %71, %cst_53 {dimension_numbers = #tpu.dot_dimension_numbers<[1], [0], [0], [1], [0, 0, 1, 1], [], []>} : vector<8x4xf32>, vector<4x224xf32>, vector<8x224xf32> -> vector<8x224xf32>
    %75 = arith.addf %70, %74 : vector<8x224xf32>
    %76 = vector.extract_strided_slice %49 {offsets = [0, 18], sizes = [4, 224], strides = [1, 1]} : vector<4x258xf32> to vector<4x224xf32>
    %c5_54 = arith.constant 5 : index
    %c0_55 = arith.constant 0 : index
    %c0_56 = arith.constant 0 : index
    %77 = vector.load %arg1[%c5_54, %c0_55, %c0_56] : memref<9x8x4xf32, #tpu.memory_space<vmem>>, vector<1x8x4xf32>
    %78 = vector.shape_cast %77 : vector<1x8x4xf32> to vector<8x4xf32>
    %cst_57 = arith.constant dense<0.000000e+00> : vector<8x224xf32>
    %79 = tpu.matmul %78, %76, %cst_57 {dimension_numbers = #tpu.dot_dimension_numbers<[1], [0], [0], [1], [0, 0, 1, 1], [], []>} : vector<8x4xf32>, vector<4x224xf32>, vector<8x224xf32> -> vector<8x224xf32>
    %80 = arith.addf %75, %79 : vector<8x224xf32>
    %81 = vector.extract_strided_slice %49 {offsets = [0, 32], sizes = [4, 224], strides = [1, 1]} : vector<4x258xf32> to vector<4x224xf32>
    %c6_58 = arith.constant 6 : index
    %c0_59 = arith.constant 0 : index
    %c0_60 = arith.constant 0 : index
    %82 = vector.load %arg1[%c6_58, %c0_59, %c0_60] : memref<9x8x4xf32, #tpu.memory_space<vmem>>, vector<1x8x4xf32>
    %83 = vector.shape_cast %82 : vector<1x8x4xf32> to vector<8x4xf32>
    %cst_61 = arith.constant dense<0.000000e+00> : vector<8x224xf32>
    %84 = tpu.matmul %83, %81, %cst_61 {dimension_numbers = #tpu.dot_dimension_numbers<[1], [0], [0], [1], [0, 0, 1, 1], [], []>} : vector<8x4xf32>, vector<4x224xf32>, vector<8x224xf32> -> vector<8x224xf32>
    %85 = arith.addf %80, %84 : vector<8x224xf32>
    %86 = vector.extract_strided_slice %49 {offsets = [0, 33], sizes = [4, 224], strides = [1, 1]} : vector<4x258xf32> to vector<4x224xf32>
    %c7_62 = arith.constant 7 : index
    %c0_63 = arith.constant 0 : index
    %c0_64 = arith.constant 0 : index
    %87 = vector.load %arg1[%c7_62, %c0_63, %c0_64] : memref<9x8x4xf32, #tpu.memory_space<vmem>>, vector<1x8x4xf32>
    %88 = vector.shape_cast %87 : vector<1x8x4xf32> to vector<8x4xf32>
    %cst_65 = arith.constant dense<0.000000e+00> : vector<8x224xf32>
    %89 = tpu.matmul %88, %86, %cst_65 {dimension_numbers = #tpu.dot_dimension_numbers<[1], [0], [0], [1], [0, 0, 1, 1], [], []>} : vector<8x4xf32>, vector<4x224xf32>, vector<8x224xf32> -> vector<8x224xf32>
    %90 = arith.addf %85, %89 : vector<8x224xf32>
    %91 = vector.extract_strided_slice %49 {offsets = [0, 34], sizes = [4, 224], strides = [1, 1]} : vector<4x258xf32> to vector<4x224xf32>
    %c8_66 = arith.constant 8 : index
    %c0_67 = arith.constant 0 : index
    %c0_68 = arith.constant 0 : index
    %92 = vector.load %arg1[%c8_66, %c0_67, %c0_68] : memref<9x8x4xf32, #tpu.memory_space<vmem>>, vector<1x8x4xf32>
    %93 = vector.shape_cast %92 : vector<1x8x4xf32> to vector<8x4xf32>
    %cst_69 = arith.constant dense<0.000000e+00> : vector<8x224xf32>
    %94 = tpu.matmul %93, %91, %cst_69 {dimension_numbers = #tpu.dot_dimension_numbers<[1], [0], [0], [1], [0, 0, 1, 1], [], []>} : vector<8x4xf32>, vector<4x224xf32>, vector<8x224xf32> -> vector<8x224xf32>
    %95 = arith.addf %90, %94 : vector<8x224xf32>
    %c0_70 = arith.constant 0 : index
    %c0_71 = arith.constant 0 : index
    %96 = vector.load %arg2[%c0_70, %c0_71] : memref<1x224xf32, #tpu.memory_space<vmem>>, vector<1x224xf32>
    %cst_72 = arith.constant 0.000000e+00 : f32
    %97 = vector.broadcast %cst_72 : f32 to vector<8x1xf32>
    %cst_73 = arith.constant 0.000000e+00 : f32
    %98 = vector.broadcast %cst_73 : f32 to vector<8x1xf32>
    %99 = vector.broadcast %96 : vector<1x224xf32> to vector<8x224xf32>
    %100 = arith.mulf %47, %99 : vector<8x224xf32>
    %cst_74 = arith.constant dense<0.000000e+00> : vector<8xf32>
    %101 = vector.multi_reduction <add>, %100, %cst_74 [1] : vector<8x224xf32> to vector<8xf32>
    %102 = vector.shape_cast %101 : vector<8xf32> to vector<8x1xf32>
    %103 = arith.addf %97, %102 : vector<8x1xf32>
    %104 = arith.mulf %47, %100 : vector<8x224xf32>
    %cst_75 = arith.constant dense<0.000000e+00> : vector<8xf32>
    %105 = vector.multi_reduction <add>, %104, %cst_75 [1] : vector<8x224xf32> to vector<8xf32>
    %106 = vector.shape_cast %105 : vector<8xf32> to vector<8x1xf32>
    %107 = arith.addf %98, %106 : vector<8x1xf32>
    %108 = vector.broadcast %96 : vector<1x224xf32> to vector<8x224xf32>
    %109 = arith.mulf %95, %108 : vector<8x224xf32>
    %cst_76 = arith.constant dense<0.000000e+00> : vector<8xf32>
    %110 = vector.multi_reduction <add>, %109, %cst_76 [1] : vector<8x224xf32> to vector<8xf32>
    %111 = vector.shape_cast %110 : vector<8xf32> to vector<8x1xf32>
    %112 = arith.addf %103, %111 : vector<8x1xf32>
    %113 = arith.mulf %95, %109 : vector<8x224xf32>
    %cst_77 = arith.constant dense<0.000000e+00> : vector<8xf32>
    %114 = vector.multi_reduction <add>, %113, %cst_77 [1] : vector<8x224xf32> to vector<8xf32>
    %115 = vector.shape_cast %114 : vector<8xf32> to vector<8x1xf32>
    %116 = arith.addf %107, %115 : vector<8x1xf32>
    %cst_78 = arith.constant 0.00255102036 : f32
    %117 = vector.broadcast %cst_78 : f32 to vector<8x1xf32>
    %118 = arith.mulf %112, %117 : vector<8x1xf32>
    %cst_79 = arith.constant 0.00255102036 : f32
    %119 = vector.broadcast %cst_79 : f32 to vector<8x1xf32>
    %120 = arith.mulf %116, %119 : vector<8x1xf32>
    %121 = arith.mulf %118, %118 : vector<8x1xf32>
    %122 = arith.subf %120, %121 : vector<8x1xf32>
    %c0_80 = arith.constant 0 : index
    %c0_81 = arith.constant 0 : index
    %123 = vector.load %arg3[%c0_80, %c0_81] : memref<8x1xf32, #tpu.memory_space<vmem>>, vector<8x1xf32>
    %cst_82 = arith.constant 9.99999974E-6 : f32
    %124 = vector.broadcast %cst_82 : f32 to vector<8x1xf32>
    %125 = arith.addf %122, %124 : vector<8x1xf32>
    %126 = math.rsqrt %125 : vector<8x1xf32>
    %127 = arith.mulf %123, %126 : vector<8x1xf32>
    %c0_83 = arith.constant 0 : index
    %c0_84 = arith.constant 0 : index
    %128 = vector.load %arg4[%c0_83, %c0_84] : memref<8x1xf32, #tpu.memory_space<vmem>>, vector<8x1xf32>
    %129 = arith.mulf %118, %127 : vector<8x1xf32>
    %130 = arith.subf %128, %129 : vector<8x1xf32>
    %131 = vector.broadcast %127 : vector<8x1xf32> to vector<8x224xf32>
    %132 = arith.mulf %47, %131 : vector<8x224xf32>
    %133 = vector.broadcast %130 : vector<8x1xf32> to vector<8x224xf32>
    %134 = arith.addf %132, %133 : vector<8x224xf32>
    %cst_85 = arith.constant 0.000000e+00 : f32
    %135 = vector.broadcast %cst_85 : f32 to vector<8x224xf32>
    %136 = arith.maximumf %134, %135 : vector<8x224xf32>
    %c0_86 = arith.constant 0 : index
    %c0_87 = arith.constant 0 : index
    %c0_88 = arith.constant 0 : index
    %137 = vector.load %arg5[%c0_86, %c0_87, %c0_88] : memref<2x8x224xf32, #tpu.memory_space<vmem>>, vector<1x8x224xf32>
    %138 = vector.shape_cast %137 : vector<1x8x224xf32> to vector<8x224xf32>
    %139 = vector.shape_cast %136 : vector<8x224xf32> to vector<1x8x224xf32>
    tpu.vector_store %arg5[%c0_86, %c0_87, %c0_88], %139 {strides = array<i32>} : memref<2x8x224xf32, #tpu.memory_space<vmem>>, vector<1x8x224xf32>,
    %140 = vector.broadcast %127 : vector<8x1xf32> to vector<8x224xf32>
    %141 = arith.mulf %95, %140 : vector<8x224xf32>
    %142 = vector.broadcast %130 : vector<8x1xf32> to vector<8x224xf32>
    %143 = arith.addf %141, %142 : vector<8x224xf32>
    %cst_89 = arith.constant 0.000000e+00 : f32
    %144 = vector.broadcast %cst_89 : f32 to vector<8x224xf32>
    %145 = arith.maximumf %143, %144 : vector<8x224xf32>
    %c1_90 = arith.constant 1 : index
    %c0_91 = arith.constant 0 : index
    %c0_92 = arith.constant 0 : index
    %146 = vector.load %arg5[%c1_90, %c0_91, %c0_92] : memref<2x8x224xf32, #tpu.memory_space<vmem>>, vector<1x8x224xf32>
    %147 = vector.shape_cast %146 : vector<1x8x224xf32> to vector<8x224xf32>
    %148 = vector.shape_cast %145 : vector<8x224xf32> to vector<1x8x224xf32>
    tpu.vector_store %arg5[%c1_90, %c0_91, %c0_92], %148 {strides = array<i32>} : memref<2x8x224xf32, #tpu.memory_space<vmem>>, vector<1x8x224xf32>,
    return
  }
}

</mosaic_0001>

<llo_original>
// kernel: tpu_custom_call.1
$region0: #{tpu_custom_call.1}
  #allocation0 [shape = 'u32[]', space=smem, size = 0x4, offset = 0x4, fixed_abs, tag = 'smem constant byte address 0x4 - core index']
  #allocation1 [shape = 'u32[144,128]{1,0:T(1,128)}', space=vmem, size = 0x12000, scoped, tag = 'internal scratch']
  %s0 = inlined_call_operand.vmem [shape: f32[2,4,258], index: 0, kind: input, shape index: {}]
  %s1 = inlined_call_operand.vmem [shape: f32[9,8,4], index: 1, kind: input, shape index: {}]
  %s2 = inlined_call_operand.vmem [shape: f32[1,224], index: 2, kind: input, shape index: {}]
  %s3 = inlined_call_operand.vmem [shape: f32[8,1], index: 3, kind: input, shape index: {}]
  %s4 = inlined_call_operand.vmem [shape: f32[8,1], index: 4, kind: input, shape index: {}]
  %s5 = inlined_call_operand.hbm [shape: f32[2,8,224], index: 5, kind: output, shape index: {}]
  %s6 = sld [smem:[#allocation0]]
  $region30: #{tpu_custom_call.1} parent=0
    _
  %s8 = ssub.s32 1, %s6
  %s9 = scalar_select 0, %s8, %s6
  $region1: #{tpu_custom_call.1} parent=0
    #allocation2 [shape = 'u8[16384]{0}', space=vmem, size = 0x4000, scoped, tag = 'output window, operand 0, single buffered']
    #allocation3 [shape = 's32[1]{0}', space=sflag, size = 0x4, scoped, tag = 'scoped memory for tpu_custom_call.1']
    %10 = vsyncpa [#allocation3], 0
    // Predicated region
    $region2: #{tpu_custom_call.1} parent=1 // pred_check
      _
    $region3: #{tpu_custom_call.1} parent=1 // pred_check_branch
      %12 = sbr.rel (0) target = $region5
    $region4: #{tpu_custom_call.1} parent=1 // pred_region
      _
    $region5: #{tpu_custom_call.1} parent=1 // pred_fallthru
      _
    // Predicated region
    $region6: #{tpu_custom_call.1} parent=1 // pred_check
      _
    $region7: #{tpu_custom_call.1} parent=1 // pred_check_branch
      %14 = sbr.rel (0) target = $region9
    $region8: #{tpu_custom_call.1} parent=1 // pred_region
      _
    $region9: #{tpu_custom_call.1} parent=1 // pred_fallthru
      _
    // Predicated region
    $region10: #{tpu_custom_call.1} parent=1 // pred_check
      _
    $region11: #{tpu_custom_call.1} parent=1 // pred_check_branch
      %16 = sbr.rel (0) target = $region13
    $region12: #{tpu_custom_call.1} parent=1 // pred_region
      _
    $region13: #{tpu_custom_call.1} parent=1 // pred_fallthru
      _
    // Predicated region
    $region14: #{tpu_custom_call.1} parent=1 // pred_check
      _
    $region15: #{tpu_custom_call.1} parent=1 // pred_check_branch
      %18 = sbr.rel (0) target = $region17
    $region16: #{tpu_custom_call.1} parent=1 // pred_region
      _
    $region17: #{tpu_custom_call.1} parent=1 // pred_fallthru
      _
    // Predicated region
    $region18: #{tpu_custom_call.1} parent=1 // pred_check
      _
    $region19: #{tpu_custom_call.1} parent=1 // pred_check_branch
      %20 = sbr.rel (0) target = $region21
    $region20: #{tpu_custom_call.1} parent=1 // pred_region
      _
    $region21: #{tpu_custom_call.1} parent=1 // pred_fallthru
      _
    %v21 = vld [vmem:[%s0] sm:$0xff]
    %v22 = vld [vmem:[%s0 + $0x8] sm:$0xf]
    %v23 = vld [vmem:[%s1] sm:$0xff]
    %s24 = scalar_lea.vmem %s1, 8
    %v25 = vld [vmem:[%s24] sm:$0xff]
    %v27 = vcombine.high %v21, %v21
    %28 = vrot.lane.b32.xlu0 %v21, 127
    %v29 = vpop.permute.xlu0 %28
    %30 = vrot.lane.b32.xlu0 %v27, 127
    %v31 = vpop.permute.xlu0 %30
    %vm32 = vcmask 1039360
    %v33 = vsel %vm32, %v29, %v31
    %vm34 = vcmask 31744
    %v36 = vsel %vm34, %v25, 0
    %vm38 = vcmask 1043456
    %v39 = vsel %vm38, %v33, 0
    %v41 = vsel %vm38, %v31, 0
    %43 = vmatprep.subr.mxu0 %v41
    %44 = vmatpush1.msra.mxu0 %v39
    %45 = vmatprep.subr.mxu0 0.0
    %46 = vmatpush1.msra.mxu0 0.0
    %47 = vmatprep.subr.mxu0 0.0
    %48 = vmatpush1.msra.mxu0 0.0
    %49 = vmatprep.subr.mxu0 0.0
    %50 = vmatpush1.msra.mxu0 0.0
    %51 = vmatprep.subr.mxu0 0.0
    %52 = vmatpush1.msra.mxu0 0.0
    %53 = vmatprep.subr.mxu0 0.0
    %54 = vmatpush1.msra.mxu0 0.0
    %55 = vmatprep.subr.mxu0 0.0
    %56 = vmatpush1.msra.mxu0 0.0
    %57 = vmatprep.subr.mxu0 0.0
    %58 = vmatpush1.msra.mxu0 0.0
    %59 = vmatprep.subr.mxu0 0.0
    %60 = vmatpush1.msra.mxu0 0.0
    %61 = vmatprep.subr.mxu0 0.0
    %62 = vmatpush1.msra.mxu0 0.0
    %63 = vmatprep.subr.mxu0 0.0
    %64 = vmatpush1.msra.mxu0 0.0
    %65 = vmatprep.subr.mxu0 0.0
    %66 = vmatpush1.msra.mxu0 0.0
    %67 = vmatprep.subr.mxu0 0.0
    %68 = vmatpush1.msra.mxu0 0.0
    %69 = vmatprep.subr.mxu0 0.0
    %70 = vmatpush1.msra.mxu0 0.0
    %71 = vmatprep.subr.mxu0 0.0
    %72 = vmatpush1.msra.mxu0 0.0
    %73 = vmatprep.subr.mxu0 0.0
    %74 = vmatpush1.msra.mxu0 0.0
    %75 = vmatprep.subr.mxu0 0.0
    %76 = vmatpush1.msra.mxu0 0.0
    %77 = vmatprep.subr.mxu0 0.0
    %78 = vmatpush1.msra.mxu0 0.0
    %79 = vmatprep.subr.mxu0 0.0
    %80 = vmatpush1.msra.mxu0 0.0
    %81 = vmatprep.subr.mxu0 0.0
    %82 = vmatpush1.msra.mxu0 0.0
    %83 = vmatprep.subr.mxu0 0.0
    %84 = vmatpush1.msra.mxu0 0.0
    %85 = vmatprep.subr.mxu0 0.0
    %86 = vmatpush1.msra.mxu0 0.0
    %87 = vmatprep.subr.mxu0 0.0
    %88 = vmatpush1.msra.mxu0 0.0
    %89 = vmatprep.subr.mxu0 0.0
    %90 = vmatpush1.msra.mxu0 0.0
    %91 = vmatprep.subr.mxu0 0.0
    %92 = vmatpush1.msra.mxu0 0.0
    %93 = vmatprep.subr.mxu0 0.0
    %94 = vmatpush1.msra.mxu0 0.0
    %95 = vmatprep.subr.mxu0 0.0
    %96 = vmatpush1.msra.mxu0 0.0
    %97 = vmatprep.subr.mxu0 0.0
    %98 = vmatpush1.msra.mxu0 0.0
    %99 = vmatprep.subr.mxu0 0.0
    %100 = vmatpush1.msra.mxu0 0.0
    %101 = vmatprep.subr.mxu0 0.0
    %102 = vmatpush1.msra.mxu0 0.0
    %103 = vmatprep.subr.mxu0 0.0
    %104 = vmatpush1.msra.mxu0 0.0
    %105 = vmatprep.subr.mxu0 0.0
    %106 = vmatpush1.msra.mxu0 0.0
    %107 = vmatprep.mubr.f32.mxu0 0.0
    %108 = vmatmul.mubr.f32.gmra.mrb[0].mxu0 %v36
    %v109 = vpop.f32.mrb[0].mxu0
    %v110 = vadd.f32 0.0, %v109
    %v111 = vpop.f32.mrb[0].mxu0
    %v112 = vadd.f32 0.0, %v111
    %113 = vdwg.mxu0
    %v115 = vsel %vm34, %v23, 0
    %v117 = vsel %vm38, %v21, 0
    %v119 = vsel %vm38, %v27, 0
    %121 = vmatprep.subr.mxu0 %v119
    %122 = vmatpush1.msra.mxu0 %v117
    %123 = vmatprep.subr.mxu0 0.0
    %124 = vmatpush1.msra.mxu0 0.0
    %125 = vmatprep.subr.mxu0 0.0
    %126 = vmatpush1.msra.mxu0 0.0
    %127 = vmatprep.subr.mxu0 0.0
    %128 = vmatpush1.msra.mxu0 0.0
    %129 = vmatprep.subr.mxu0 0.0
    %130 = vmatpush1.msra.mxu0 0.0
    %131 = vmatprep.subr.mxu0 0.0
    %132 = vmatpush1.msra.mxu0 0.0
    %133 = vmatprep.subr.mxu0 0.0
    %134 = vmatpush1.msra.mxu0 0.0
    %135 = vmatprep.subr.mxu0 0.0
    %136 = vmatpush1.msra.mxu0 0.0
    %137 = vmatprep.subr.mxu0 0.0
    %138 = vmatpush1.msra.mxu0 0.0
    %139 = vmatprep.subr.mxu0 0.0
    %140 = vmatpush1.msra.mxu0 0.0
    %141 = vmatprep.subr.mxu0 0.0
    %142 = vmatpush1.msra.mxu0 0.0
    %143 = vmatprep.subr.mxu0 0.0
    %144 = vmatpush1.msra.mxu0 0.0
    %145 = vmatprep.subr.mxu0 0.0
    %146 = vmatpush1.msra.mxu0 0.0
    %147 = vmatprep.subr.mxu0 0.0
    %148 = vmatpush1.msra.mxu0 0.0
    %149 = vmatprep.subr.mxu0 0.0
    %150 = vmatpush1.msra.mxu0 0.0
    %151 = vmatprep.subr.mxu0 0.0
    %152 = vmatpush1.msra.mxu0 0.0
    %153 = vmatprep.subr.mxu0 0.0
    %154 = vmatpush1.msra.mxu0 0.0
    %155 = vmatprep.subr.mxu0 0.0
    %156 = vmatpush1.msra.mxu0 0.0
    %157 = vmatprep.subr.mxu0 0.0
    %158 = vmatpush1.msra.mxu0 0.0
    %159 = vmatprep.subr.mxu0 0.0
    %160 = vmatpush1.msra.mxu0 0.0
    %161 = vmatprep.subr.mxu0 0.0
    %162 = vmatpush1.msra.mxu0 0.0
    %163 = vmatprep.subr.mxu0 0.0
    %164 = vmatpush1.msra.mxu0 0.0
    %165 = vmatprep.subr.mxu0 0.0
    %166 = vmatpush1.msra.mxu0 0.0
    %167 = vmatprep.subr.mxu0 0.0
    %168 = vmatpush1.msra.mxu0 0.0
    %169 = vmatprep.subr.mxu0 0.0
    %170 = vmatpush1.msra.mxu0 0.0
    %171 = vmatprep.subr.mxu0 0.0
    %172 = vmatpush1.msra.mxu0 0.0
    %173 = vmatprep.subr.mxu0 0.0
    %174 = vmatpush1.msra.mxu0 0.0
    %175 = vmatprep.subr.mxu0 0.0
    %176 = vmatpush1.msra.mxu0 0.0
    %177 = vmatprep.subr.mxu0 0.0
    %178 = vmatpush1.msra.mxu0 0.0
    %179 = vmatprep.subr.mxu0 0.0
    %180 = vmatpush1.msra.mxu0 0.0
    %181 = vmatprep.subr.mxu0 0.0
    %182 = vmatpush1.msra.mxu0 0.0
    %183 = vmatprep.subr.mxu0 0.0
    %184 = vmatpush1.msra.mxu0 0.0
    %185 = vmatprep.mubr.f32.mxu0 0.0
    %186 = vmatmul.mubr.f32.gmra.mrb[0].mxu0 %v115
    %v187 = vpop.f32.mrb[0].mxu0
    %v188 = vadd.f32 %v110, %v187
    %v189 = vpop.f32.mrb[0].mxu0
    %v190 = vadd.f32 %v112, %v189
    %191 = vdwg.mxu0
    %s192 = scalar_lea.vmem %s1, 16
    %v193 = vld [vmem:[%s192] sm:$0xff]
    %194 = vrot.lane.b32.xlu0 %v21, 126
    %v195 = vpop.permute.xlu0 %194
    %196 = vrot.lane.b32.xlu0 %v27, 126
    %v197 = vpop.permute.xlu0 %196
    %vm198 = vcmask 1031168
    %v199 = vsel %vm198, %v195, %v197
    %v201 = vsel %vm34, %v193, 0
    %v203 = vsel %vm38, %v199, 0
    %v205 = vsel %vm38, %v197, 0
    %207 = vmatprep.subr.mxu0 %v205
    %208 = vmatpush1.msra.mxu0 %v203
    %209 = vmatprep.subr.mxu0 0.0
    %210 = vmatpush1.msra.mxu0 0.0
    %211 = vmatprep.subr.mxu0 0.0
    %212 = vmatpush1.msra.mxu0 0.0
    %213 = vmatprep.subr.mxu0 0.0
    %214 = vmatpush1.msra.mxu0 0.0
    %215 = vmatprep.subr.mxu0 0.0
    %216 = vmatpush1.msra.mxu0 0.0
    %217 = vmatprep.subr.mxu0 0.0
    %218 = vmatpush1.msra.mxu0 0.0
    %219 = vmatprep.subr.mxu0 0.0
    %220 = vmatpush1.msra.mxu0 0.0
    %221 = vmatprep.subr.mxu0 0.0
    %222 = vmatpush1.msra.mxu0 0.0
    %223 = vmatprep.subr.mxu0 0.0
    %224 = vmatpush1.msra.mxu0 0.0
    %225 = vmatprep.subr.mxu0 0.0
    %226 = vmatpush1.msra.mxu0 0.0
    %227 = vmatprep.subr.mxu0 0.0
    %228 = vmatpush1.msra.mxu0 0.0
    %229 = vmatprep.subr.mxu0 0.0
    %230 = vmatpush1.msra.mxu0 0.0
    %231 = vmatprep.subr.mxu0 0.0
    %232 = vmatpush1.msra.mxu0 0.0
    %233 = vmatprep.subr.mxu0 0.0
    %234 = vmatpush1.msra.mxu0 0.0
    %235 = vmatprep.subr.mxu0 0.0
    %236 = vmatpush1.msra.mxu0 0.0
    %237 = vmatprep.subr.mxu0 0.0
    %238 = vmatpush1.msra.mxu0 0.0
    %239 = vmatprep.subr.mxu0 0.0
    %240 = vmatpush1.msra.mxu0 0.0
    %241 = vmatprep.subr.mxu0 0.0
    %242 = vmatpush1.msra.mxu0 0.0
    %243 = vmatprep.subr.mxu0 0.0
    %244 = vmatpush1.msra.mxu0 0.0
    %245 = vmatprep.subr.mxu0 0.0
    %246 = vmatpush1.msra.mxu0 0.0
    %247 = vmatprep.subr.mxu0 0.0
    %248 = vmatpush1.msra.mxu0 0.0
    %249 = vmatprep.subr.mxu0 0.0
    %250 = vmatpush1.msra.mxu0 0.0
    %251 = vmatprep.subr.mxu0 0.0
    %252 = vmatpush1.msra.mxu0 0.0
    %253 = vmatprep.subr.mxu0 0.0
    %254 = vmatpush1.msra.mxu0 0.0
    %255 = vmatprep.subr.mxu0 0.0
    %256 = vmatpush1.msra.mxu0 0.0
    %257 = vmatprep.subr.mxu0 0.0
    %258 = vmatpush1.msra.mxu0 0.0
    %259 = vmatprep.subr.mxu0 0.0
    %260 = vmatpush1.msra.mxu0 0.0
    %261 = vmatprep.subr.mxu0 0.0
    %262 = vmatpush1.msra.mxu0 0.0
    %263 = vmatprep.subr.mxu0 0.0
    %264 = vmatpush1.msra.mxu0 0.0
    %265 = vmatprep.subr.mxu0 0.0
    %266 = vmatpush1.msra.mxu0 0.0
    %267 = vmatprep.subr.mxu0 0.0
    %268 = vmatpush1.msra.mxu0 0.0
    %269 = vmatprep.subr.mxu0 0.0
    %270 = vmatpush1.msra.mxu0 0.0
    %271 = vmatprep.mubr.f32.mxu0 0.0
    %272 = vmatmul.mubr.f32.gmra.mrb[0].mxu0 %v201
    %v273 = vpop.f32.mrb[0].mxu0
    %v274 = vadd.f32 0.0, %v273
    %v275 = vpop.f32.mrb[0].mxu0
    %v276 = vadd.f32 0.0, %v275
    %277 = vdwg.mxu0
    %v278 = vadd.f32 %v188, %v274
    %v279 = vadd.f32 %v190, %v276
    %s280 = scalar_lea.vmem %s1, 24
    %v281 = vld [vmem:[%s280] sm:$0xff]
    %282 = vrot.lane.b32.xlu0 %v21, 112
    %v283 = vpop.permute.xlu0 %282
    %284 = vrot.lane.b32.xlu0 %v27, 112
    %v285 = vpop.permute.xlu0 %284
    %vm286 = vcmask 916480
    %v287 = vsel %vm286, %v283, %v285
    %v289 = vsel %vm34, %v281, 0
    %v291 = vsel %vm38, %v287, 0
    %v293 = vsel %vm38, %v285, 0
    %295 = vmatprep.subr.mxu0 %v293
    %296 = vmatpush1.msra.mxu0 %v291
    %297 = vmatprep.subr.mxu0 0.0
    %298 = vmatpush1.msra.mxu0 0.0
    %299 = vmatprep.subr.mxu0 0.0
    %300 = vmatpush1.msra.mxu0 0.0
    %301 = vmatprep.subr.mxu0 0.0
    %302 = vmatpush1.msra.mxu0 0.0
    %303 = vmatprep.subr.mxu0 0.0
    %304 = vmatpush1.msra.mxu0 0.0
    %305 = vmatprep.subr.mxu0 0.0
    %306 = vmatpush1.msra.mxu0 0.0
    %307 = vmatprep.subr.mxu0 0.0
    %308 = vmatpush1.msra.mxu0 0.0
    %309 = vmatprep.subr.mxu0 0.0
    %310 = vmatpush1.msra.mxu0 0.0
    %311 = vmatprep.subr.mxu0 0.0
    %312 = vmatpush1.msra.mxu0 0.0
    %313 = vmatprep.subr.mxu0 0.0
    %314 = vmatpush1.msra.mxu0 0.0
    %315 = vmatprep.subr.mxu0 0.0
    %316 = vmatpush1.msra.mxu0 0.0
    %317 = vmatprep.subr.mxu0 0.0
    %318 = vmatpush1.msra.mxu0 0.0
    %319 = vmatprep.subr.mxu0 0.0
    %320 = vmatpush1.msra.mxu0 0.0
    %321 = vmatprep.subr.mxu0 0.0
    %322 = vmatpush1.msra.mxu0 0.0
    %323 = vmatprep.subr.mxu0 0.0
    %324 = vmatpush1.msra.mxu0 0.0
    %325 = vmatprep.subr.mxu0 0.0
    %326 = vmatpush1.msra.mxu0 0.0
    %327 = vmatprep.subr.mxu0 0.0
    %328 = vmatpush1.msra.mxu0 0.0
    %329 = vmatprep.subr.mxu0 0.0
    %330 = vmatpush1.msra.mxu0 0.0
    %331 = vmatprep.subr.mxu0 0.0
    %332 = vmatpush1.msra.mxu0 0.0
    %333 = vmatprep.subr.mxu0 0.0
    %334 = vmatpush1.msra.mxu0 0.0
    %335 = vmatprep.subr.mxu0 0.0
    %336 = vmatpush1.msra.mxu0 0.0
    %337 = vmatprep.subr.mxu0 0.0
    %338 = vmatpush1.msra.mxu0 0.0
    %339 = vmatprep.subr.mxu0 0.0
    %340 = vmatpush1.msra.mxu0 0.0
    %341 = vmatprep.subr.mxu0 0.0
    %342 = vmatpush1.msra.mxu0 0.0
    %343 = vmatprep.subr.mxu0 0.0
    %344 = vmatpush1.msra.mxu0 0.0
    %345 = vmatprep.subr.mxu0 0.0
    %346 = vmatpush1.msra.mxu0 0.0
    %347 = vmatprep.subr.mxu0 0.0
    %348 = vmatpush1.msra.mxu0 0.0
    %349 = vmatprep.subr.mxu0 0.0
    %350 = vmatpush1.msra.mxu0 0.0
    %351 = vmatprep.subr.mxu0 0.0
    %352 = vmatpush1.msra.mxu0 0.0
    %353 = vmatprep.subr.mxu0 0.0
    %354 = vmatpush1.msra.mxu0 0.0
    %355 = vmatprep.subr.mxu0 0.0
    %356 = vmatpush1.msra.mxu0 0.0
    %357 = vmatprep.subr.mxu0 0.0
    %358 = vmatpush1.msra.mxu0 0.0
    %359 = vmatprep.mubr.f32.mxu0 0.0
    %360 = vmatmul.mubr.f32.gmra.mrb[0].mxu0 %v289
    %v361 = vpop.f32.mrb[0].mxu0
    %v362 = vadd.f32 0.0, %v361
    %v363 = vpop.f32.mrb[0].mxu0
    %v364 = vadd.f32 0.0, %v363
    %365 = vdwg.mxu0
    %v366 = vadd.f32 %v278, %v362
    %v367 = vadd.f32 %v279, %v364
    %s368 = scalar_lea.vmem %s1, 32
    %v369 = vld [vmem:[%s368] sm:$0xff]
    %370 = vrot.lane.b32.xlu0 %v21, 111
    %v371 = vpop.permute.xlu0 %370
    %372 = vrot.lane.b32.xlu0 %v27, 111
    %v373 = vpop.permute.xlu0 %372
    %vm374 = vcmask 908288
    %v375 = vsel %vm374, %v371, %v373
    %v377 = vsel %vm34, %v369, 0
    %v379 = vsel %vm38, %v375, 0
    %v381 = vsel %vm38, %v373, 0
    %383 = vmatprep.subr.mxu0 %v381
    %384 = vmatpush1.msra.mxu0 %v379
    %385 = vmatprep.subr.mxu0 0.0
    %386 = vmatpush1.msra.mxu0 0.0
    %387 = vmatprep.subr.mxu0 0.0
    %388 = vmatpush1.msra.mxu0 0.0
    %389 = vmatprep.subr.mxu0 0.0
    %390 = vmatpush1.msra.mxu0 0.0
    %391 = vmatprep.subr.mxu0 0.0
    %392 = vmatpush1.msra.mxu0 0.0
    %393 = vmatprep.subr.mxu0 0.0
    %394 = vmatpush1.msra.mxu0 0.0
    %395 = vmatprep.subr.mxu0 0.0
    %396 = vmatpush1.msra.mxu0 0.0
    %397 = vmatprep.subr.mxu0 0.0
    %398 = vmatpush1.msra.mxu0 0.0
    %399 = vmatprep.subr.mxu0 0.0
    %400 = vmatpush1.msra.mxu0 0.0
    %401 = vmatprep.subr.mxu0 0.0
    %402 = vmatpush1.msra.mxu0 0.0
    %403 = vmatprep.subr.mxu0 0.0
    %404 = vmatpush1.msra.mxu0 0.0
    %405 = vmatprep.subr.mxu0 0.0
    %406 = vmatpush1.msra.mxu0 0.0
    %407 = vmatprep.subr.mxu0 0.0
    %408 = vmatpush1.msra.mxu0 0.0
    %409 = vmatprep.subr.mxu0 0.0
    %410 = vmatpush1.msra.mxu0 0.0
    %411 = vmatprep.subr.mxu0 0.0
    %412 = vmatpush1.msra.mxu0 0.0
    %413 = vmatprep.subr.mxu0 0.0
    %414 = vmatpush1.msra.mxu0 0.0
    %415 = vmatprep.subr.mxu0 0.0
    %416 = vmatpush1.msra.mxu0 0.0
    %417 = vmatprep.subr.mxu0 0.0
    %418 = vmatpush1.msra.mxu0 0.0
    %419 = vmatprep.subr.mxu0 0.0
    %420 = vmatpush1.msra.mxu0 0.0
    %421 = vmatprep.subr.mxu0 0.0
    %422 = vmatpush1.msra.mxu0 0.0
    %423 = vmatprep.subr.mxu0 0.0
    %424 = vmatpush1.msra.mxu0 0.0
    %425 = vmatprep.subr.mxu0 0.0
    %426 = vmatpush1.msra.mxu0 0.0
    %427 = vmatprep.subr.mxu0 0.0
    %428 = vmatpush1.msra.mxu0 0.0
    %429 = vmatprep.subr.mxu0 0.0
    %430 = vmatpush1.msra.mxu0 0.0
    %431 = vmatprep.subr.mxu0 0.0
    %432 = vmatpush1.msra.mxu0 0.0
    %433 = vmatprep.subr.mxu0 0.0
    %434 = vmatpush1.msra.mxu0 0.0
    %435 = vmatprep.subr.mxu0 0.0
    %436 = vmatpush1.msra.mxu0 0.0
    %437 = vmatprep.subr.mxu0 0.0
    %438 = vmatpush1.msra.mxu0 0.0
    %439 = vmatprep.subr.mxu0 0.0
    %440 = vmatpush1.msra.mxu0 0.0
    %441 = vmatprep.subr.mxu0 0.0
    %442 = vmatpush1.msra.mxu0 0.0
    %443 = vmatprep.subr.mxu0 0.0
    %444 = vmatpush1.msra.mxu0 0.0
    %445 = vmatprep.subr.mxu0 0.0
    %446 = vmatpush1.msra.mxu0 0.0
    %447 = vmatprep.mubr.f32.mxu0 0.0
    %448 = vmatmul.mubr.f32.gmra.mrb[0].mxu0 %v377
    %v449 = vpop.f32.mrb[0].mxu0
    %v450 = vadd.f32 0.0, %v449
    %v451 = vpop.f32.mrb[0].mxu0
    %v452 = vadd.f32 0.0, %v451
    %453 = vdwg.mxu0
    %v454 = vadd.f32 %v366, %v450
    %v455 = vadd.f32 %v367, %v452
    %s456 = scalar_lea.vmem %s1, 40
    %v457 = vld [vmem:[%s456] sm:$0xff]
    %458 = vrot.lane.b32.xlu0 %v21, 110
    %v459 = vpop.permute.xlu0 %458
    %460 = vrot.lane.b32.xlu0 %v27, 110
    %v461 = vpop.permute.xlu0 %460
    %vm462 = vcmask 900096
    %v463 = vsel %vm462, %v459, %v461
    %v465 = vsel %vm34, %v457, 0
    %v467 = vsel %vm38, %v463, 0
    %v469 = vsel %vm38, %v461, 0
    %471 = vmatprep.subr.mxu0 %v469
    %472 = vmatpush1.msra.mxu0 %v467
    %473 = vmatprep.subr.mxu0 0.0
    %474 = vmatpush1.msra.mxu0 0.0
    %475 = vmatprep.subr.mxu0 0.0
    %476 = vmatpush1.msra.mxu0 0.0
    %477 = vmatprep.subr.mxu0 0.0
    %478 = vmatpush1.msra.mxu0 0.0
    %479 = vmatprep.subr.mxu0 0.0
    %480 = vmatpush1.msra.mxu0 0.0
    %481 = vmatprep.subr.mxu0 0.0
    %482 = vmatpush1.msra.mxu0 0.0
    %483 = vmatprep.subr.mxu0 0.0
    %484 = vmatpush1.msra.mxu0 0.0
    %485 = vmatprep.subr.mxu0 0.0
    %486 = vmatpush1.msra.mxu0 0.0
    %487 = vmatprep.subr.mxu0 0.0
    %488 = vmatpush1.msra.mxu0 0.0
    %489 = vmatprep.subr.mxu0 0.0
    %490 = vmatpush1.msra.mxu0 0.0
    %491 = vmatprep.subr.mxu0 0.0
    %492 = vmatpush1.msra.mxu0 0.0
    %493 = vmatprep.subr.mxu0 0.0
    %494 = vmatpush1.msra.mxu0 0.0
    %495 = vmatprep.subr.mxu0 0.0
    %496 = vmatpush1.msra.mxu0 0.0
    %497 = vmatprep.subr.mxu0 0.0
    %498 = vmatpush1.msra.mxu0 0.0
    %499 = vmatprep.subr.mxu0 0.0
    %500 = vmatpush1.msra.mxu0 0.0
    %501 = vmatprep.subr.mxu0 0.0
    %502 = vmatpush1.msra.mxu0 0.0
    %503 = vmatprep.subr.mxu0 0.0
    %504 = vmatpush1.msra.mxu0 0.0
    %505 = vmatprep.subr.mxu0 0.0
    %506 = vmatpush1.msra.mxu0 0.0
    %507 = vmatprep.subr.mxu0 0.0
    %508 = vmatpush1.msra.mxu0 0.0
    %509 = vmatprep.subr.mxu0 0.0
    %510 = vmatpush1.msra.mxu0 0.0
    %511 = vmatprep.subr.mxu0 0.0
    %512 = vmatpush1.msra.mxu0 0.0
    %513 = vmatprep.subr.mxu0 0.0
    %514 = vmatpush1.msra.mxu0 0.0
    %515 = vmatprep.subr.mxu0 0.0
    %516 = vmatpush1.msra.mxu0 0.0
    %517 = vmatprep.subr.mxu0 0.0
    %518 = vmatpush1.msra.mxu0 0.0
    %519 = vmatprep.subr.mxu0 0.0
    %520 = vmatpush1.msra.mxu0 0.0
    %521 = vmatprep.subr.mxu0 0.0
    %522 = vmatpush1.msra.mxu0 0.0
    %523 = vmatprep.subr.mxu0 0.0
    %524 = vmatpush1.msra.mxu0 0.0
    %525 = vmatprep.subr.mxu0 0.0
    %526 = vmatpush1.msra.mxu0 0.0
    %527 = vmatprep.subr.mxu0 0.0
    %528 = vmatpush1.msra.mxu0 0.0
    %529 = vmatprep.subr.mxu0 0.0
    %530 = vmatpush1.msra.mxu0 0.0
    %531 = vmatprep.subr.mxu0 0.0
    %532 = vmatpush1.msra.mxu0 0.0
    %533 = vmatprep.subr.mxu0 0.0
    %534 = vmatpush1.msra.mxu0 0.0
    %535 = vmatprep.mubr.f32.mxu0 0.0
    %536 = vmatmul.mubr.f32.gmra.mrb[0].mxu0 %v465
    %v537 = vpop.f32.mrb[0].mxu0
    %v538 = vadd.f32 0.0, %v537
    %v539 = vpop.f32.mrb[0].mxu0
    %v540 = vadd.f32 0.0, %v539
    %541 = vdwg.mxu0
    %v542 = vadd.f32 %v454, %v538
    %v543 = vadd.f32 %v455, %v540
    %s544 = scalar_lea.vmem %s1, 48
    %v545 = vld [vmem:[%s544] sm:$0xff]
    %546 = vrot.lane.b32.xlu0 %v21, 96
    %v547 = vpop.permute.xlu0 %546
    %548 = vrot.lane.b32.xlu0 %v27, 96
    %v549 = vpop.permute.xlu0 %548
    %vm550 = vcmask 785408
    %v551 = vsel %vm550, %v547, %v549
    %v553 = vsel %vm34, %v545, 0
    %v555 = vsel %vm38, %v551, 0
    %v557 = vsel %vm38, %v549, 0
    %559 = vmatprep.subr.mxu0 %v557
    %560 = vmatpush1.msra.mxu0 %v555
    %561 = vmatprep.subr.mxu0 0.0
    %562 = vmatpush1.msra.mxu0 0.0
    %563 = vmatprep.subr.mxu0 0.0
    %564 = vmatpush1.msra.mxu0 0.0
    %565 = vmatprep.subr.mxu0 0.0
    %566 = vmatpush1.msra.mxu0 0.0
    %567 = vmatprep.subr.mxu0 0.0
    %568 = vmatpush1.msra.mxu0 0.0
    %569 = vmatprep.subr.mxu0 0.0
    %570 = vmatpush1.msra.mxu0 0.0
    %571 = vmatprep.subr.mxu0 0.0
    %572 = vmatpush1.msra.mxu0 0.0
    %573 = vmatprep.subr.mxu0 0.0
    %574 = vmatpush1.msra.mxu0 0.0
    %575 = vmatprep.subr.mxu0 0.0
    %576 = vmatpush1.msra.mxu0 0.0
    %577 = vmatprep.subr.mxu0 0.0
    %578 = vmatpush1.msra.mxu0 0.0
    %579 = vmatprep.subr.mxu0 0.0
    %580 = vmatpush1.msra.mxu0 0.0
    %581 = vmatprep.subr.mxu0 0.0
    %582 = vmatpush1.msra.mxu0 0.0
    %583 = vmatprep.subr.mxu0 0.0
    %584 = vmatpush1.msra.mxu0 0.0
    %585 = vmatprep.subr.mxu0 0.0
    %586 = vmatpush1.msra.mxu0 0.0
    %587 = vmatprep.subr.mxu0 0.0
    %588 = vmatpush1.msra.mxu0 0.0
    %589 = vmatprep.subr.mxu0 0.0
    %590 = vmatpush1.msra.mxu0 0.0
    %591 = vmatprep.subr.mxu0 0.0
    %592 = vmatpush1.msra.mxu0 0.0
    %593 = vmatprep.subr.mxu0 0.0
    %594 = vmatpush1.msra.mxu0 0.0
    %595 = vmatprep.subr.mxu0 0.0
    %596 = vmatpush1.msra.mxu0 0.0
    %597 = vmatprep.subr.mxu0 0.0
    %598 = vmatpush1.msra.mxu0 0.0
    %599 = vmatprep.subr.mxu0 0.0
    %600 = vmatpush1.msra.mxu0 0.0
    %601 = vmatprep.subr.mxu0 0.0
    %602 = vmatpush1.msra.mxu0 0.0
    %603 = vmatprep.subr.mxu0 0.0
    %604 = vmatpush1.msra.mxu0 0.0
    %605 = vmatprep.subr.mxu0 0.0
    %606 = vmatpush1.msra.mxu0 0.0
    %607 = vmatprep.subr.mxu0 0.0
    %608 = vmatpush1.msra.mxu0 0.0
    %609 = vmatprep.subr.mxu0 0.0
    %610 = vmatpush1.msra.mxu0 0.0
    %611 = vmatprep.subr.mxu0 0.0
    %612 = vmatpush1.msra.mxu0 0.0
    %613 = vmatprep.subr.mxu0 0.0
    %614 = vmatpush1.msra.mxu0 0.0
    %615 = vmatprep.subr.mxu0 0.0
    %616 = vmatpush1.msra.mxu0 0.0
    %617 = vmatprep.subr.mxu0 0.0
    %618 = vmatpush1.msra.mxu0 0.0
    %619 = vmatprep.subr.mxu0 0.0
    %620 = vmatpush1.msra.mxu0 0.0
    %621 = vmatprep.subr.mxu0 0.0
    %622 = vmatpush1.msra.mxu0 0.0
    %623 = vmatprep.mubr.f32.mxu0 0.0
    %624 = vmatmul.mubr.f32.gmra.mrb[0].mxu0 %v553
    %v625 = vpop.f32.mrb[0].mxu0
    %v626 = vadd.f32 0.0, %v625
    %v627 = vpop.f32.mrb[0].mxu0
    %v628 = vadd.f32 0.0, %v627
    %629 = vdwg.mxu0
    %v630 = vadd.f32 %v542, %v626
    %v631 = vadd.f32 %v543, %v628
    %s632 = scalar_lea.vmem %s1, 56
    %v633 = vld [vmem:[%s632] sm:$0xff]
    %635 = vrot.lane.b32.xlu0 %v21, 95
    %v636 = vpop.permute.xlu0 %635
    %637 = vrot.lane.b32.xlu0 %v27, 95
    %v638 = vpop.permute.xlu0 %637
    %639 = vrot.lane.b32.xlu0 %v22, 95
    %v640 = vpop.permute.xlu0 %639
    %vm641 = vcmask 777216
    %v642 = vsel %vm641, %v636, %v638
    %v643 = vsel %vm641, %v638, %v640
    %v645 = vsel %vm34, %v633, 0
    %v647 = vsel %vm38, %v642, 0
    %v649 = vsel %vm38, %v643, 0
    %651 = vmatprep.subr.mxu0 %v649
    %652 = vmatpush1.msra.mxu0 %v647
    %653 = vmatprep.subr.mxu0 0.0
    %654 = vmatpush1.msra.mxu0 0.0
    %655 = vmatprep.subr.mxu0 0.0
    %656 = vmatpush1.msra.mxu0 0.0
    %657 = vmatprep.subr.mxu0 0.0
    %658 = vmatpush1.msra.mxu0 0.0
    %659 = vmatprep.subr.mxu0 0.0
    %660 = vmatpush1.msra.mxu0 0.0
    %661 = vmatprep.subr.mxu0 0.0
    %662 = vmatpush1.msra.mxu0 0.0
    %663 = vmatprep.subr.mxu0 0.0
    %664 = vmatpush1.msra.mxu0 0.0
    %665 = vmatprep.subr.mxu0 0.0
    %666 = vmatpush1.msra.mxu0 0.0
    %667 = vmatprep.subr.mxu0 0.0
    %668 = vmatpush1.msra.mxu0 0.0
    %669 = vmatprep.subr.mxu0 0.0
    %670 = vmatpush1.msra.mxu0 0.0
    %671 = vmatprep.subr.mxu0 0.0
    %672 = vmatpush1.msra.mxu0 0.0
    %673 = vmatprep.subr.mxu0 0.0
    %674 = vmatpush1.msra.mxu0 0.0
    %675 = vmatprep.subr.mxu0 0.0
    %676 = vmatpush1.msra.mxu0 0.0
    %677 = vmatprep.subr.mxu0 0.0
    %678 = vmatpush1.msra.mxu0 0.0
    %679 = vmatprep.subr.mxu0 0.0
    %680 = vmatpush1.msra.mxu0 0.0
    %681 = vmatprep.subr.mxu0 0.0
    %682 = vmatpush1.msra.mxu0 0.0
    %683 = vmatprep.subr.mxu0 0.0
    %684 = vmatpush1.msra.mxu0 0.0
    %685 = vmatprep.subr.mxu0 0.0
    %686 = vmatpush1.msra.mxu0 0.0
    %687 = vmatprep.subr.mxu0 0.0
    %688 = vmatpush1.msra.mxu0 0.0
    %689 = vmatprep.subr.mxu0 0.0
    %690 = vmatpush1.msra.mxu0 0.0
    %691 = vmatprep.subr.mxu0 0.0
    %692 = vmatpush1.msra.mxu0 0.0
    %693 = vmatprep.subr.mxu0 0.0
    %694 = vmatpush1.msra.mxu0 0.0
    %695 = vmatprep.subr.mxu0 0.0
    %696 = vmatpush1.msra.mxu0 0.0
    %697 = vmatprep.subr.mxu0 0.0
    %698 = vmatpush1.msra.mxu0 0.0
    %699 = vmatprep.subr.mxu0 0.0
    %700 = vmatpush1.msra.mxu0 0.0
    %701 = vmatprep.subr.mxu0 0.0
    %702 = vmatpush1.msra.mxu0 0.0
    %703 = vmatprep.subr.mxu0 0.0
    %704 = vmatpush1.msra.mxu0 0.0
    %705 = vmatprep.subr.mxu0 0.0
    %706 = vmatpush1.msra.mxu0 0.0
    %707 = vmatprep.subr.mxu0 0.0
    %708 = vmatpush1.msra.mxu0 0.0
    %709 = vmatprep.subr.mxu0 0.0
    %710 = vmatpush1.msra.mxu0 0.0
    %711 = vmatprep.subr.mxu0 0.0
    %712 = vmatpush1.msra.mxu0 0.0
    %713 = vmatprep.subr.mxu0 0.0
    %714 = vmatpush1.msra.mxu0 0.0
    %715 = vmatprep.mubr.f32.mxu0 0.0
    %716 = vmatmul.mubr.f32.gmra.mrb[0].mxu0 %v645
    %v717 = vpop.f32.mrb[0].mxu0
    %v718 = vadd.f32 0.0, %v717
    %v719 = vpop.f32.mrb[0].mxu0
    %v720 = vadd.f32 0.0, %v719
    %721 = vdwg.mxu0
    %v722 = vadd.f32 %v630, %v718
    %v723 = vadd.f32 %v631, %v720
    %s724 = scalar_lea.vmem %s1, 64
    %v725 = vld [vmem:[%s724] sm:$0xff]
    %726 = vrot.lane.b32.xlu0 %v21, 94
    %v727 = vpop.permute.xlu0 %726
    %728 = vrot.lane.b32.xlu0 %v27, 94
    %v729 = vpop.permute.xlu0 %728
    %730 = vrot.lane.b32.xlu0 %v22, 94
    %v731 = vpop.permute.xlu0 %730
    %vm732 = vcmask 769024
    %v733 = vsel %vm732, %v727, %v729
    %v734 = vsel %vm732, %v729, %v731
    %v736 = vsel %vm34, %v725, 0
    %v738 = vsel %vm38, %v733, 0
    %v740 = vsel %vm38, %v734, 0
    %742 = vmatprep.subr.mxu0 %v740
    %743 = vmatpush1.msra.mxu0 %v738
    %744 = vmatprep.subr.mxu0 0.0
    %745 = vmatpush1.msra.mxu0 0.0
    %746 = vmatprep.subr.mxu0 0.0
    %747 = vmatpush1.msra.mxu0 0.0
    %748 = vmatprep.subr.mxu0 0.0
    %749 = vmatpush1.msra.mxu0 0.0
    %750 = vmatprep.subr.mxu0 0.0
    %751 = vmatpush1.msra.mxu0 0.0
    %752 = vmatprep.subr.mxu0 0.0
    %753 = vmatpush1.msra.mxu0 0.0
    %754 = vmatprep.subr.mxu0 0.0
    %755 = vmatpush1.msra.mxu0 0.0
    %756 = vmatprep.subr.mxu0 0.0
    %757 = vmatpush1.msra.mxu0 0.0
    %758 = vmatprep.subr.mxu0 0.0
    %759 = vmatpush1.msra.mxu0 0.0
    %760 = vmatprep.subr.mxu0 0.0
    %761 = vmatpush1.msra.mxu0 0.0
    %762 = vmatprep.subr.mxu0 0.0
    %763 = vmatpush1.msra.mxu0 0.0
    %764 = vmatprep.subr.mxu0 0.0
    %765 = vmatpush1.msra.mxu0 0.0
    %766 = vmatprep.subr.mxu0 0.0
    %767 = vmatpush1.msra.mxu0 0.0
    %768 = vmatprep.subr.mxu0 0.0
    %769 = vmatpush1.msra.mxu0 0.0
    %770 = vmatprep.subr.mxu0 0.0
    %771 = vmatpush1.msra.mxu0 0.0
    %772 = vmatprep.subr.mxu0 0.0
    %773 = vmatpush1.msra.mxu0 0.0
    %774 = vmatprep.subr.mxu0 0.0
    %775 = vmatpush1.msra.mxu0 0.0
    %776 = vmatprep.subr.mxu0 0.0
    %777 = vmatpush1.msra.mxu0 0.0
    %778 = vmatprep.subr.mxu0 0.0
    %779 = vmatpush1.msra.mxu0 0.0
    %780 = vmatprep.subr.mxu0 0.0
    %781 = vmatpush1.msra.mxu0 0.0
    %782 = vmatprep.subr.mxu0 0.0
    %783 = vmatpush1.msra.mxu0 0.0
    %784 = vmatprep.subr.mxu0 0.0
    %785 = vmatpush1.msra.mxu0 0.0
    %786 = vmatprep.subr.mxu0 0.0
    %787 = vmatpush1.msra.mxu0 0.0
    %788 = vmatprep.subr.mxu0 0.0
    %789 = vmatpush1.msra.mxu0 0.0
    %790 = vmatprep.subr.mxu0 0.0
    %791 = vmatpush1.msra.mxu0 0.0
    %792 = vmatprep.subr.mxu0 0.0
    %793 = vmatpush1.msra.mxu0 0.0
    %794 = vmatprep.subr.mxu0 0.0
    %795 = vmatpush1.msra.mxu0 0.0
    %796 = vmatprep.subr.mxu0 0.0
    %797 = vmatpush1.msra.mxu0 0.0
    %798 = vmatprep.subr.mxu0 0.0
    %799 = vmatpush1.msra.mxu0 0.0
    %800 = vmatprep.subr.mxu0 0.0
    %801 = vmatpush1.msra.mxu0 0.0
    %802 = vmatprep.subr.mxu0 0.0
    %803 = vmatpush1.msra.mxu0 0.0
    %804 = vmatprep.subr.mxu0 0.0
    %805 = vmatpush1.msra.mxu0 0.0
    %806 = vmatprep.mubr.f32.mxu0 0.0
    %807 = vmatmul.mubr.f32.gmra.mrb[0].mxu0 %v736
    %v808 = vpop.f32.mrb[0].mxu0
    %v809 = vadd.f32 0.0, %v808
    %v810 = vpop.f32.mrb[0].mxu0
    %v811 = vadd.f32 0.0, %v810
    %812 = vdwg.mxu0
    %v813 = vadd.f32 %v722, %v809
    %v814 = vadd.f32 %v723, %v811
    %s815 = scalar_lea.vmem %s0, 12
    %v816 = vld [vmem:[%s815] sm:$0xff]
    %v817 = vld [vmem:[%s815 + $0x8] sm:$0xf]
    %v819 = vcombine.high %v816, %v816
    %820 = vrot.lane.b32.xlu0 %v816, 127
    %v821 = vpop.permute.xlu0 %820
    %822 = vrot.lane.b32.xlu0 %v819, 127
    %v823 = vpop.permute.xlu0 %822
    %v824 = vsel %vm32, %v821, %v823
    %v825 = vsel %vm38, %v824, 0
    %v827 = vsel %vm38, %v823, 0
    %829 = vmatprep.subr.mxu0 %v827
    %830 = vmatpush1.msra.mxu0 %v825
    %831 = vmatprep.subr.mxu0 0.0
    %832 = vmatpush1.msra.mxu0 0.0
    %833 = vmatprep.subr.mxu0 0.0
    %834 = vmatpush1.msra.mxu0 0.0
    %835 = vmatprep.subr.mxu0 0.0
    %836 = vmatpush1.msra.mxu0 0.0
    %837 = vmatprep.subr.mxu0 0.0
    %838 = vmatpush1.msra.mxu0 0.0
    %839 = vmatprep.subr.mxu0 0.0
    %840 = vmatpush1.msra.mxu0 0.0
    %841 = vmatprep.subr.mxu0 0.0
    %842 = vmatpush1.msra.mxu0 0.0
    %843 = vmatprep.subr.mxu0 0.0
    %844 = vmatpush1.msra.mxu0 0.0
    %845 = vmatprep.subr.mxu0 0.0
    %846 = vmatpush1.msra.mxu0 0.0
    %847 = vmatprep.subr.mxu0 0.0
    %848 = vmatpush1.msra.mxu0 0.0
    %849 = vmatprep.subr.mxu0 0.0
    %850 = vmatpush1.msra.mxu0 0.0
    %851 = vmatprep.subr.mxu0 0.0
    %852 = vmatpush1.msra.mxu0 0.0
    %853 = vmatprep.subr.mxu0 0.0
    %854 = vmatpush1.msra.mxu0 0.0
    %855 = vmatprep.subr.mxu0 0.0
    %856 = vmatpush1.msra.mxu0 0.0
    %857 = vmatprep.subr.mxu0 0.0
    %858 = vmatpush1.msra.mxu0 0.0
    %859 = vmatprep.subr.mxu0 0.0
    %860 = vmatpush1.msra.mxu0 0.0
    %861 = vmatprep.subr.mxu0 0.0
    %862 = vmatpush1.msra.mxu0 0.0
    %863 = vmatprep.subr.mxu0 0.0
    %864 = vmatpush1.msra.mxu0 0.0
    %865 = vmatprep.subr.mxu0 0.0
    %866 = vmatpush1.msra.mxu0 0.0
    %867 = vmatprep.subr.mxu0 0.0
    %868 = vmatpush1.msra.mxu0 0.0
    %869 = vmatprep.subr.mxu0 0.0
    %870 = vmatpush1.msra.mxu0 0.0
    %871 = vmatprep.subr.mxu0 0.0
    %872 = vmatpush1.msra.mxu0 0.0
    %873 = vmatprep.subr.mxu0 0.0
    %874 = vmatpush1.msra.mxu0 0.0
    %875 = vmatprep.subr.mxu0 0.0
    %876 = vmatpush1.msra.mxu0 0.0
    %877 = vmatprep.subr.mxu0 0.0
    %878 = vmatpush1.msra.mxu0 0.0
    %879 = vmatprep.subr.mxu0 0.0
    %880 = vmatpush1.msra.mxu0 0.0
    %881 = vmatprep.subr.mxu0 0.0
    %882 = vmatpush1.msra.mxu0 0.0
    %883 = vmatprep.subr.mxu0 0.0
    %884 = vmatpush1.msra.mxu0 0.0
    %885 = vmatprep.subr.mxu0 0.0
    %886 = vmatpush1.msra.mxu0 0.0
    %887 = vmatprep.subr.mxu0 0.0
    %888 = vmatpush1.msra.mxu0 0.0
    %889 = vmatprep.subr.mxu0 0.0
    %890 = vmatpush1.msra.mxu0 0.0
    %891 = vmatprep.subr.mxu0 0.0
    %892 = vmatpush1.msra.mxu0 0.0
    %893 = vmatprep.mubr.f32.mxu0 0.0
    %894 = vmatmul.mubr.f32.gmra.mrb[0].mxu0 %v36
    %v895 = vpop.f32.mrb[0].mxu0
    %v896 = vadd.f32 0.0, %v895
    %v897 = vpop.f32.mrb[0].mxu0
    %v898 = vadd.f32 0.0, %v897
    %899 = vdwg.mxu0
    %v900 = vsel %vm38, %v816, 0
    %v902 = vsel %vm38, %v819, 0
    %904 = vmatprep.subr.mxu0 %v902
    %905 = vmatpush1.msra.mxu0 %v900
    %906 = vmatprep.subr.mxu0 0.0
    %907 = vmatpush1.msra.mxu0 0.0
    %908 = vmatprep.subr.mxu0 0.0
    %909 = vmatpush1.msra.mxu0 0.0
    %910 = vmatprep.subr.mxu0 0.0
    %911 = vmatpush1.msra.mxu0 0.0
    %912 = vmatprep.subr.mxu0 0.0
    %913 = vmatpush1.msra.mxu0 0.0
    %914 = vmatprep.subr.mxu0 0.0
    %915 = vmatpush1.msra.mxu0 0.0
    %916 = vmatprep.subr.mxu0 0.0
    %917 = vmatpush1.msra.mxu0 0.0
    %918 = vmatprep.subr.mxu0 0.0
    %919 = vmatpush1.msra.mxu0 0.0
    %920 = vmatprep.subr.mxu0 0.0
    %921 = vmatpush1.msra.mxu0 0.0
    %922 = vmatprep.subr.mxu0 0.0
    %923 = vmatpush1.msra.mxu0 0.0
    %924 = vmatprep.subr.mxu0 0.0
    %925 = vmatpush1.msra.mxu0 0.0
    %926 = vmatprep.subr.mxu0 0.0
    %927 = vmatpush1.msra.mxu0 0.0
    %928 = vmatprep.subr.mxu0 0.0
    %929 = vmatpush1.msra.mxu0 0.0
    %930 = vmatprep.subr.mxu0 0.0
    %931 = vmatpush1.msra.mxu0 0.0
    %932 = vmatprep.subr.mxu0 0.0
    %933 = vmatpush1.msra.mxu0 0.0
    %934 = vmatprep.subr.mxu0 0.0
    %935 = vmatpush1.msra.mxu0 0.0
    %936 = vmatprep.subr.mxu0 0.0
    %937 = vmatpush1.msra.mxu0 0.0
    %938 = vmatprep.subr.mxu0 0.0
    %939 = vmatpush1.msra.mxu0 0.0
    %940 = vmatprep.subr.mxu0 0.0
    %941 = vmatpush1.msra.mxu0 0.0
    %942 = vmatprep.subr.mxu0 0.0
    %943 = vmatpush1.msra.mxu0 0.0
    %944 = vmatprep.subr.mxu0 0.0
    %945 = vmatpush1.msra.mxu0 0.0
    %946 = vmatprep.subr.mxu0 0.0
    %947 = vmatpush1.msra.mxu0 0.0
    %948 = vmatprep.subr.mxu0 0.0
    %949 = vmatpush1.msra.mxu0 0.0
    %950 = vmatprep.subr.mxu0 0.0
    %951 = vmatpush1.msra.mxu0 0.0
    %952 = vmatprep.subr.mxu0 0.0
    %953 = vmatpush1.msra.mxu0 0.0
    %954 = vmatprep.subr.mxu0 0.0
    %955 = vmatpush1.msra.mxu0 0.0
    %956 = vmatprep.subr.mxu0 0.0
    %957 = vmatpush1.msra.mxu0 0.0
    %958 = vmatprep.subr.mxu0 0.0
    %959 = vmatpush1.msra.mxu0 0.0
    %960 = vmatprep.subr.mxu0 0.0
    %961 = vmatpush1.msra.mxu0 0.0
    %962 = vmatprep.subr.mxu0 0.0
    %963 = vmatpush1.msra.mxu0 0.0
    %964 = vmatprep.subr.mxu0 0.0
    %965 = vmatpush1.msra.mxu0 0.0
    %966 = vmatprep.subr.mxu0 0.0
    %967 = vmatpush1.msra.mxu0 0.0
    %968 = vmatprep.mubr.f32.mxu0 0.0
    %969 = vmatmul.mubr.f32.gmra.mrb[0].mxu0 %v115
    %v970 = vpop.f32.mrb[0].mxu0
    %v971 = vadd.f32 %v896, %v970
    %v972 = vpop.f32.mrb[0].mxu0
    %v973 = vadd.f32 %v898, %v972
    %974 = vdwg.mxu0
    %975 = vrot.lane.b32.xlu0 %v816, 126
    %v976 = vpop.permute.xlu0 %975
    %977 = vrot.lane.b32.xlu0 %v819, 126
    %v978 = vpop.permute.xlu0 %977
    %v979 = vsel %vm198, %v976, %v978
    %v980 = vsel %vm38, %v979, 0
    %v982 = vsel %vm38, %v978, 0
    %984 = vmatprep.subr.mxu0 %v982
    %985 = vmatpush1.msra.mxu0 %v980
    %986 = vmatprep.subr.mxu0 0.0
    %987 = vmatpush1.msra.mxu0 0.0
    %988 = vmatprep.subr.mxu0 0.0
    %989 = vmatpush1.msra.mxu0 0.0
    %990 = vmatprep.subr.mxu0 0.0
    %991 = vmatpush1.msra.mxu0 0.0
    %992 = vmatprep.subr.mxu0 0.0
    %993 = vmatpush1.msra.mxu0 0.0
    %994 = vmatprep.subr.mxu0 0.0
    %995 = vmatpush1.msra.mxu0 0.0
    %996 = vmatprep.subr.mxu0 0.0
    %997 = vmatpush1.msra.mxu0 0.0
    %998 = vmatprep.subr.mxu0 0.0
    %999 = vmatpush1.msra.mxu0 0.0
    %1000 = vmatprep.subr.mxu0 0.0
    %1001 = vmatpush1.msra.mxu0 0.0
    %1002 = vmatprep.subr.mxu0 0.0
    %1003 = vmatpush1.msra.mxu0 0.0
    %1004 = vmatprep.subr.mxu0 0.0
    %1005 = vmatpush1.msra.mxu0 0.0
    %1006 = vmatprep.subr.mxu0 0.0
    %1007 = vmatpush1.msra.mxu0 0.0
    %1008 = vmatprep.subr.mxu0 0.0
    %1009 = vmatpush1.msra.mxu0 0.0
    %1010 = vmatprep.subr.mxu0 0.0
    %1011 = vmatpush1.msra.mxu0 0.0
    %1012 = vmatprep.subr.mxu0 0.0
    %1013 = vmatpush1.msra.mxu0 0.0
    %1014 = vmatprep.subr.mxu0 0.0
    %1015 = vmatpush1.msra.mxu0 0.0
    %1016 = vmatprep.subr.mxu0 0.0
    %1017 = vmatpush1.msra.mxu0 0.0
    %1018 = vmatprep.subr.mxu0 0.0
    %1019 = vmatpush1.msra.mxu0 0.0
    %1020 = vmatprep.subr.mxu0 0.0
    %1021 = vmatpush1.msra.mxu0 0.0
    %1022 = vmatprep.subr.mxu0 0.0
    %1023 = vmatpush1.msra.mxu0 0.0
    %1024 = vmatprep.subr.mxu0 0.0
    %1025 = vmatpush1.msra.mxu0 0.0
    %1026 = vmatprep.subr.mxu0 0.0
    %1027 = vmatpush1.msra.mxu0 0.0
    %1028 = vmatprep.subr.mxu0 0.0
    %1029 = vmatpush1.msra.mxu0 0.0
    %1030 = vmatprep.subr.mxu0 0.0
    %1031 = vmatpush1.msra.mxu0 0.0
    %1032 = vmatprep.subr.mxu0 0.0
    %1033 = vmatpush1.msra.mxu0 0.0
    %1034 = vmatprep.subr.mxu0 0.0
    %1035 = vmatpush1.msra.mxu0 0.0
    %1036 = vmatprep.subr.mxu0 0.0
    %1037 = vmatpush1.msra.mxu0 0.0
    %1038 = vmatprep.subr.mxu0 0.0
    %1039 = vmatpush1.msra.mxu0 0.0
    %1040 = vmatprep.subr.mxu0 0.0
    %1041 = vmatpush1.msra.mxu0 0.0
    %1042 = vmatprep.subr.mxu0 0.0
    %1043 = vmatpush1.msra.mxu0 0.0
    %1044 = vmatprep.subr.mxu0 0.0
    %1045 = vmatpush1.msra.mxu0 0.0
    %1046 = vmatprep.subr.mxu0 0.0
    %1047 = vmatpush1.msra.mxu0 0.0
    %1048 = vmatprep.mubr.f32.mxu0 0.0
    %1049 = vmatmul.mubr.f32.gmra.mrb[0].mxu0 %v201
    %v1050 = vpop.f32.mrb[0].mxu0
    %v1051 = vadd.f32 0.0, %v1050
    %v1052 = vpop.f32.mrb[0].mxu0
    %v1053 = vadd.f32 0.0, %v1052
    %1054 = vdwg.mxu0
    %v1055 = vadd.f32 %v971, %v1051
    %v1056 = vadd.f32 %v973, %v1053
    %1057 = vrot.lane.b32.xlu0 %v816, 112
    %v1058 = vpop.permute.xlu0 %1057
    %1059 = vrot.lane.b32.xlu0 %v819, 112
    %v1060 = vpop.permute.xlu0 %1059
    %v1061 = vsel %vm286, %v1058, %v1060
    %v1062 = vsel %vm38, %v1061, 0
    %v1064 = vsel %vm38, %v1060, 0
    %1066 = vmatprep.subr.mxu0 %v1064
    %1067 = vmatpush1.msra.mxu0 %v1062
    %1068 = vmatprep.subr.mxu0 0.0
    %1069 = vmatpush1.msra.mxu0 0.0
    %1070 = vmatprep.subr.mxu0 0.0
    %1071 = vmatpush1.msra.mxu0 0.0
    %1072 = vmatprep.subr.mxu0 0.0
    %1073 = vmatpush1.msra.mxu0 0.0
    %1074 = vmatprep.subr.mxu0 0.0
    %1075 = vmatpush1.msra.mxu0 0.0
    %1076 = vmatprep.subr.mxu0 0.0
    %1077 = vmatpush1.msra.mxu0 0.0
    %1078 = vmatprep.subr.mxu0 0.0
    %1079 = vmatpush1.msra.mxu0 0.0
    %1080 = vmatprep.subr.mxu0 0.0
    %1081 = vmatpush1.msra.mxu0 0.0
    %1082 = vmatprep.subr.mxu0 0.0
    %1083 = vmatpush1.msra.mxu0 0.0
    %1084 = vmatprep.subr.mxu0 0.0
    %1085 = vmatpush1.msra.mxu0 0.0
    %1086 = vmatprep.subr.mxu0 0.0
    %1087 = vmatpush1.msra.mxu0 0.0
    %1088 = vmatprep.subr.mxu0 0.0
    %1089 = vmatpush1.msra.mxu0 0.0
    %1090 = vmatprep.subr.mxu0 0.0
    %1091 = vmatpush1.msra.mxu0 0.0
    %1092 = vmatprep.subr.mxu0 0.0
    %1093 = vmatpush1.msra.mxu0 0.0
    %1094 = vmatprep.subr.mxu0 0.0
    %1095 = vmatpush1.msra.mxu0 0.0
    %1096 = vmatprep.subr.mxu0 0.0
    %1097 = vmatpush1.msra.mxu0 0.0
    %1098 = vmatprep.subr.mxu0 0.0
    %1099 = vmatpush1.msra.mxu0 0.0
    %1100 = vmatprep.subr.mxu0 0.0
    %1101 = vmatpush1.msra.mxu0 0.0
    %1102 = vmatprep.subr.mxu0 0.0
    %1103 = vmatpush1.msra.mxu0 0.0
    %1104 = vmatprep.subr.mxu0 0.0
    %1105 = vmatpush1.msra.mxu0 0.0
    %1106 = vmatprep.subr.mxu0 0.0
    %1107 = vmatpush1.msra.mxu0 0.0
    %1108 = vmatprep.subr.mxu0 0.0
    %1109 = vmatpush1.msra.mxu0 0.0
    %1110 = vmatprep.subr.mxu0 0.0
    %1111 = vmatpush1.msra.mxu0 0.0
    %1112 = vmatprep.subr.mxu0 0.0
    %1113 = vmatpush1.msra.mxu0 0.0
    %1114 = vmatprep.subr.mxu0 0.0
    %1115 = vmatpush1.msra.mxu0 0.0
    %1116 = vmatprep.subr.mxu0 0.0
    %1117 = vmatpush1.msra.mxu0 0.0
    %1118 = vmatprep.subr.mxu0 0.0
    %1119 = vmatpush1.msra.mxu0 0.0
    %1120 = vmatprep.subr.mxu0 0.0
    %1121 = vmatpush1.msra.mxu0 0.0
    %1122 = vmatprep.subr.mxu0 0.0
    %1123 = vmatpush1.msra.mxu0 0.0
    %1124 = vmatprep.subr.mxu0 0.0
    %1125 = vmatpush1.msra.mxu0 0.0
    %1126 = vmatprep.subr.mxu0 0.0
    %1127 = vmatpush1.msra.mxu0 0.0
    %1128 = vmatprep.subr.mxu0 0.0
    %1129 = vmatpush1.msra.mxu0 0.0
    %1130 = vmatprep.mubr.f32.mxu0 0.0
    %1131 = vmatmul.mubr.f32.gmra.mrb[0].mxu0 %v289
    %v1132 = vpop.f32.mrb[0].mxu0
    %v1133 = vadd.f32 0.0, %v1132
    %v1134 = vpop.f32.mrb[0].mxu0
    %v1135 = vadd.f32 0.0, %v1134
    %1136 = vdwg.mxu0
    %v1137 = vadd.f32 %v1055, %v1133
    %v1138 = vadd.f32 %v1056, %v1135
    %1139 = vrot.lane.b32.xlu0 %v816, 111
    %v1140 = vpop.permute.xlu0 %1139
    %1141 = vrot.lane.b32.xlu0 %v819, 111
    %v1142 = vpop.permute.xlu0 %1141
    %v1143 = vsel %vm374, %v1140, %v1142
    %v1144 = vsel %vm38, %v1143, 0
    %v1146 = vsel %vm38, %v1142, 0
    %1148 = vmatprep.subr.mxu0 %v1146
    %1149 = vmatpush1.msra.mxu0 %v1144
    %1150 = vmatprep.subr.mxu0 0.0
    %1151 = vmatpush1.msra.mxu0 0.0
    %1152 = vmatprep.subr.mxu0 0.0
    %1153 = vmatpush1.msra.mxu0 0.0
    %1154 = vmatprep.subr.mxu0 0.0
    %1155 = vmatpush1.msra.mxu0 0.0
    %1156 = vmatprep.subr.mxu0 0.0
    %1157 = vmatpush1.msra.mxu0 0.0
    %1158 = vmatprep.subr.mxu0 0.0
    %1159 = vmatpush1.msra.mxu0 0.0
    %1160 = vmatprep.subr.mxu0 0.0
    %1161 = vmatpush1.msra.mxu0 0.0
    %1162 = vmatprep.subr.mxu0 0.0
    %1163 = vmatpush1.msra.mxu0 0.0
    %1164 = vmatprep.subr.mxu0 0.0
    %1165 = vmatpush1.msra.mxu0 0.0
    %1166 = vmatprep.subr.mxu0 0.0
    %1167 = vmatpush1.msra.mxu0 0.0
    %1168 = vmatprep.subr.mxu0 0.0
    %1169 = vmatpush1.msra.mxu0 0.0
    %1170 = vmatprep.subr.mxu0 0.0
    %1171 = vmatpush1.msra.mxu0 0.0
    %1172 = vmatprep.subr.mxu0 0.0
    %1173 = vmatpush1.msra.mxu0 0.0
    %1174 = vmatprep.subr.mxu0 0.0
    %1175 = vmatpush1.msra.mxu0 0.0
    %1176 = vmatprep.subr.mxu0 0.0
    %1177 = vmatpush1.msra.mxu0 0.0
    %1178 = vmatprep.subr.mxu0 0.0
    %1179 = vmatpush1.msra.mxu0 0.0
    %1180 = vmatprep.subr.mxu0 0.0
    %1181 = vmatpush1.msra.mxu0 0.0
    %1182 = vmatprep.subr.mxu0 0.0
    %1183 = vmatpush1.msra.mxu0 0.0
    %1184 = vmatprep.subr.mxu0 0.0
    %1185 = vmatpush1.msra.mxu0 0.0
    %1186 = vmatprep.subr.mxu0 0.0
    %1187 = vmatpush1.msra.mxu0 0.0
    %1188 = vmatprep.subr.mxu0 0.0
    %1189 = vmatpush1.msra.mxu0 0.0
    %1190 = vmatprep.subr.mxu0 0.0
    %1191 = vmatpush1.msra.mxu0 0.0
    %1192 = vmatprep.subr.mxu0 0.0
    %1193 = vmatpush1.msra.mxu0 0.0
    %1194 = vmatprep.subr.mxu0 0.0
    %1195 = vmatpush1.msra.mxu0 0.0
    %1196 = vmatprep.subr.mxu0 0.0
    %1197 = vmatpush1.msra.mxu0 0.0
    %1198 = vmatprep.subr.mxu0 0.0
    %1199 = vmatpush1.msra.mxu0 0.0
    %1200 = vmatprep.subr.mxu0 0.0
    %1201 = vmatpush1.msra.mxu0 0.0
    %1202 = vmatprep.subr.mxu0 0.0
    %1203 = vmatpush1.msra.mxu0 0.0
    %1204 = vmatprep.subr.mxu0 0.0
    %1205 = vmatpush1.msra.mxu0 0.0
    %1206 = vmatprep.subr.mxu0 0.0
    %1207 = vmatpush1.msra.mxu0 0.0
    %1208 = vmatprep.subr.mxu0 0.0
    %1209 = vmatpush1.msra.mxu0 0.0
    %1210 = vmatprep.subr.mxu0 0.0
    %1211 = vmatpush1.msra.mxu0 0.0
    %1212 = vmatprep.mubr.f32.mxu0 0.0
    %1213 = vmatmul.mubr.f32.gmra.mrb[0].mxu0 %v377
    %v1214 = vpop.f32.mrb[0].mxu0
    %v1215 = vadd.f32 0.0, %v1214
    %v1216 = vpop.f32.mrb[0].mxu0
    %v1217 = vadd.f32 0.0, %v1216
    %1218 = vdwg.mxu0
    %v1219 = vadd.f32 %v1137, %v1215
    %v1220 = vadd.f32 %v1138, %v1217
    %1221 = vrot.lane.b32.xlu0 %v816, 110
    %v1222 = vpop.permute.xlu0 %1221
    %1223 = vrot.lane.b32.xlu0 %v819, 110
    %v1224 = vpop.permute.xlu0 %1223
    %v1225 = vsel %vm462, %v1222, %v1224
    %v1226 = vsel %vm38, %v1225, 0
    %v1228 = vsel %vm38, %v1224, 0
    %1230 = vmatprep.subr.mxu0 %v1228
    %1231 = vmatpush1.msra.mxu0 %v1226
    %1232 = vmatprep.subr.mxu0 0.0
    %1233 = vmatpush1.msra.mxu0 0.0
    %1234 = vmatprep.subr.mxu0 0.0
    %1235 = vmatpush1.msra.mxu0 0.0
    %1236 = vmatprep.subr.mxu0 0.0
    %1237 = vmatpush1.msra.mxu0 0.0
    %1238 = vmatprep.subr.mxu0 0.0
    %1239 = vmatpush1.msra.mxu0 0.0
    %1240 = vmatprep.subr.mxu0 0.0
    %1241 = vmatpush1.msra.mxu0 0.0
    %1242 = vmatprep.subr.mxu0 0.0
    %1243 = vmatpush1.msra.mxu0 0.0
    %1244 = vmatprep.subr.mxu0 0.0
    %1245 = vmatpush1.msra.mxu0 0.0
    %1246 = vmatprep.subr.mxu0 0.0
    %1247 = vmatpush1.msra.mxu0 0.0
    %1248 = vmatprep.subr.mxu0 0.0
    %1249 = vmatpush1.msra.mxu0 0.0
    %1250 = vmatprep.subr.mxu0 0.0
    %1251 = vmatpush1.msra.mxu0 0.0
    %1252 = vmatprep.subr.mxu0 0.0
    %1253 = vmatpush1.msra.mxu0 0.0
    %1254 = vmatprep.subr.mxu0 0.0
    %1255 = vmatpush1.msra.mxu0 0.0
    %1256 = vmatprep.subr.mxu0 0.0
    %1257 = vmatpush1.msra.mxu0 0.0
    %1258 = vmatprep.subr.mxu0 0.0
    %1259 = vmatpush1.msra.mxu0 0.0
    %1260 = vmatprep.subr.mxu0 0.0
    %1261 = vmatpush1.msra.mxu0 0.0
    %1262 = vmatprep.subr.mxu0 0.0
    %1263 = vmatpush1.msra.mxu0 0.0
    %1264 = vmatprep.subr.mxu0 0.0
    %1265 = vmatpush1.msra.mxu0 0.0
    %1266 = vmatprep.subr.mxu0 0.0
    %1267 = vmatpush1.msra.mxu0 0.0
    %1268 = vmatprep.subr.mxu0 0.0
    %1269 = vmatpush1.msra.mxu0 0.0
    %1270 = vmatprep.subr.mxu0 0.0
    %1271 = vmatpush1.msra.mxu0 0.0
    %1272 = vmatprep.subr.mxu0 0.0
    %1273 = vmatpush1.msra.mxu0 0.0
    %1274 = vmatprep.subr.mxu0 0.0
    %1275 = vmatpush1.msra.mxu0 0.0
    %1276 = vmatprep.subr.mxu0 0.0
    %1277 = vmatpush1.msra.mxu0 0.0
    %1278 = vmatprep.subr.mxu0 0.0
    %1279 = vmatpush1.msra.mxu0 0.0
    %1280 = vmatprep.subr.mxu0 0.0
    %1281 = vmatpush1.msra.mxu0 0.0
    %1282 = vmatprep.subr.mxu0 0.0
    %1283 = vmatpush1.msra.mxu0 0.0
    %1284 = vmatprep.subr.mxu0 0.0
    %1285 = vmatpush1.msra.mxu0 0.0
    %1286 = vmatprep.subr.mxu0 0.0
    %1287 = vmatpush1.msra.mxu0 0.0
    %1288 = vmatprep.subr.mxu0 0.0
    %1289 = vmatpush1.msra.mxu0 0.0
    %1290 = vmatprep.subr.mxu0 0.0
    %1291 = vmatpush1.msra.mxu0 0.0
    %1292 = vmatprep.subr.mxu0 0.0
    %1293 = vmatpush1.msra.mxu0 0.0
    %1294 = vmatprep.mubr.f32.mxu0 0.0
    %1295 = vmatmul.mubr.f32.gmra.mrb[0].mxu0 %v465
    %v1296 = vpop.f32.mrb[0].mxu0
    %v1297 = vadd.f32 0.0, %v1296
    %v1298 = vpop.f32.mrb[0].mxu0
    %v1299 = vadd.f32 0.0, %v1298
    %1300 = vdwg.mxu0
    %v1301 = vadd.f32 %v1219, %v1297
    %v1302 = vadd.f32 %v1220, %v1299
    %1303 = vrot.lane.b32.xlu0 %v816, 96
    %v1304 = vpop.permute.xlu0 %1303
    %1305 = vrot.lane.b32.xlu0 %v819, 96
    %v1306 = vpop.permute.xlu0 %1305
    %v1307 = vsel %vm550, %v1304, %v1306
    %v1308 = vsel %vm38, %v1307, 0
    %v1310 = vsel %vm38, %v1306, 0
    %1312 = vmatprep.subr.mxu0 %v1310
    %1313 = vmatpush1.msra.mxu0 %v1308
    %1314 = vmatprep.subr.mxu0 0.0
    %1315 = vmatpush1.msra.mxu0 0.0
    %1316 = vmatprep.subr.mxu0 0.0
    %1317 = vmatpush1.msra.mxu0 0.0
    %1318 = vmatprep.subr.mxu0 0.0
    %1319 = vmatpush1.msra.mxu0 0.0
    %1320 = vmatprep.subr.mxu0 0.0
    %1321 = vmatpush1.msra.mxu0 0.0
    %1322 = vmatprep.subr.mxu0 0.0
    %1323 = vmatpush1.msra.mxu0 0.0
    %1324 = vmatprep.subr.mxu0 0.0
    %1325 = vmatpush1.msra.mxu0 0.0
    %1326 = vmatprep.subr.mxu0 0.0
    %1327 = vmatpush1.msra.mxu0 0.0
    %1328 = vmatprep.subr.mxu0 0.0
    %1329 = vmatpush1.msra.mxu0 0.0
    %1330 = vmatprep.subr.mxu0 0.0
    %1331 = vmatpush1.msra.mxu0 0.0
    %1332 = vmatprep.subr.mxu0 0.0
    %1333 = vmatpush1.msra.mxu0 0.0
    %1334 = vmatprep.subr.mxu0 0.0
    %1335 = vmatpush1.msra.mxu0 0.0
    %1336 = vmatprep.subr.mxu0 0.0
    %1337 = vmatpush1.msra.mxu0 0.0
    %1338 = vmatprep.subr.mxu0 0.0
    %1339 = vmatpush1.msra.mxu0 0.0
    %1340 = vmatprep.subr.mxu0 0.0
    %1341 = vmatpush1.msra.mxu0 0.0
    %1342 = vmatprep.subr.mxu0 0.0
    %1343 = vmatpush1.msra.mxu0 0.0
    %1344 = vmatprep.subr.mxu0 0.0
    %1345 = vmatpush1.msra.mxu0 0.0
    %1346 = vmatprep.subr.mxu0 0.0
    %1347 = vmatpush1.msra.mxu0 0.0
    %1348 = vmatprep.subr.mxu0 0.0
    %1349 = vmatpush1.msra.mxu0 0.0
    %1350 = vmatprep.subr.mxu0 0.0
    %1351 = vmatpush1.msra.mxu0 0.0
    %1352 = vmatprep.subr.mxu0 0.0
    %1353 = vmatpush1.msra.mxu0 0.0
    %1354 = vmatprep.subr.mxu0 0.0
    %1355 = vmatpush1.msra.mxu0 0.0
    %1356 = vmatprep.subr.mxu0 0.0
    %1357 = vmatpush1.msra.mxu0 0.0
    %1358 = vmatprep.subr.mxu0 0.0
    %1359 = vmatpush1.msra.mxu0 0.0
    %1360 = vmatprep.subr.mxu0 0.0
    %1361 = vmatpush1.msra.mxu0 0.0
    %1362 = vmatprep.subr.mxu0 0.0
    %1363 = vmatpush1.msra.mxu0 0.0
    %1364 = vmatprep.subr.mxu0 0.0
    %1365 = vmatpush1.msra.mxu0 0.0
    %1366 = vmatprep.subr.mxu0 0.0
    %1367 = vmatpush1.msra.mxu0 0.0
    %1368 = vmatprep.subr.mxu0 0.0
    %1369 = vmatpush1.msra.mxu0 0.0
    %1370 = vmatprep.subr.mxu0 0.0
    %1371 = vmatpush1.msra.mxu0 0.0
    %1372 = vmatprep.subr.mxu0 0.0
    %1373 = vmatpush1.msra.mxu0 0.0
    %1374 = vmatprep.subr.mxu0 0.0
    %1375 = vmatpush1.msra.mxu0 0.0
    %1376 = vmatprep.mubr.f32.mxu0 0.0
    %1377 = vmatmul.mubr.f32.gmra.mrb[0].mxu0 %v553
    %v1378 = vpop.f32.mrb[0].mxu0
    %v1379 = vadd.f32 0.0, %v1378
    %v1380 = vpop.f32.mrb[0].mxu0
    %v1381 = vadd.f32 0.0, %v1380
    %1382 = vdwg.mxu0
    %v1383 = vadd.f32 %v1301, %v1379
    %v1384 = vadd.f32 %v1302, %v1381
    %1386 = vrot.lane.b32.xlu0 %v816, 95
    %v1387 = vpop.permute.xlu0 %1386
    %1388 = vrot.lane.b32.xlu0 %v819, 95
    %v1389 = vpop.permute.xlu0 %1388
    %1390 = vrot.lane.b32.xlu0 %v817, 95
    %v1391 = vpop.permute.xlu0 %1390
    %v1392 = vsel %vm641, %v1387, %v1389
    %v1393 = vsel %vm641, %v1389, %v1391
    %v1394 = vsel %vm38, %v1392, 0
    %v1396 = vsel %vm38, %v1393, 0
    %1398 = vmatprep.subr.mxu0 %v1396
    %1399 = vmatpush1.msra.mxu0 %v1394
    %1400 = vmatprep.subr.mxu0 0.0
    %1401 = vmatpush1.msra.mxu0 0.0
    %1402 = vmatprep.subr.mxu0 0.0
    %1403 = vmatpush1.msra.mxu0 0.0
    %1404 = vmatprep.subr.mxu0 0.0
    %1405 = vmatpush1.msra.mxu0 0.0
    %1406 = vmatprep.subr.mxu0 0.0
    %1407 = vmatpush1.msra.mxu0 0.0
    %1408 = vmatprep.subr.mxu0 0.0
    %1409 = vmatpush1.msra.mxu0 0.0
    %1410 = vmatprep.subr.mxu0 0.0
    %1411 = vmatpush1.msra.mxu0 0.0
    %1412 = vmatprep.subr.mxu0 0.0
    %1413 = vmatpush1.msra.mxu0 0.0
    %1414 = vmatprep.subr.mxu0 0.0
    %1415 = vmatpush1.msra.mxu0 0.0
    %1416 = vmatprep.subr.mxu0 0.0
    %1417 = vmatpush1.msra.mxu0 0.0
    %1418 = vmatprep.subr.mxu0 0.0
    %1419 = vmatpush1.msra.mxu0 0.0
    %1420 = vmatprep.subr.mxu0 0.0
    %1421 = vmatpush1.msra.mxu0 0.0
    %1422 = vmatprep.subr.mxu0 0.0
    %1423 = vmatpush1.msra.mxu0 0.0
    %1424 = vmatprep.subr.mxu0 0.0
    %1425 = vmatpush1.msra.mxu0 0.0
    %1426 = vmatprep.subr.mxu0 0.0
    %1427 = vmatpush1.msra.mxu0 0.0
    %1428 = vmatprep.subr.mxu0 0.0
    %1429 = vmatpush1.msra.mxu0 0.0
    %1430 = vmatprep.subr.mxu0 0.0
    %1431 = vmatpush1.msra.mxu0 0.0
    %1432 = vmatprep.subr.mxu0 0.0
    %1433 = vmatpush1.msra.mxu0 0.0
    %1434 = vmatprep.subr.mxu0 0.0
    %1435 = vmatpush1.msra.mxu0 0.0
    %1436 = vmatprep.subr.mxu0 0.0
    %1437 = vmatpush1.msra.mxu0 0.0
    %1438 = vmatprep.subr.mxu0 0.0
    %1439 = vmatpush1.msra.mxu0 0.0
    %1440 = vmatprep.subr.mxu0 0.0
    %1441 = vmatpush1.msra.mxu0 0.0
    %1442 = vmatprep.subr.mxu0 0.0
    %1443 = vmatpush1.msra.mxu0 0.0
    %1444 = vmatprep.subr.mxu0 0.0
    %1445 = vmatpush1.msra.mxu0 0.0
    %1446 = vmatprep.subr.mxu0 0.0
    %1447 = vmatpush1.msra.mxu0 0.0
    %1448 = vmatprep.subr.mxu0 0.0
    %1449 = vmatpush1.msra.mxu0 0.0
    %1450 = vmatprep.subr.mxu0 0.0
    %1451 = vmatpush1.msra.mxu0 0.0
    %1452 = vmatprep.subr.mxu0 0.0
    %1453 = vmatpush1.msra.mxu0 0.0
    %1454 = vmatprep.subr.mxu0 0.0
    %1455 = vmatpush1.msra.mxu0 0.0
    %1456 = vmatprep.subr.mxu0 0.0
    %1457 = vmatpush1.msra.mxu0 0.0
    %1458 = vmatprep.subr.mxu0 0.0
    %1459 = vmatpush1.msra.mxu0 0.0
    %1460 = vmatprep.subr.mxu0 0.0
    %1461 = vmatpush1.msra.mxu0 0.0
    %1462 = vmatprep.mubr.f32.mxu0 0.0
    %1463 = vmatmul.mubr.f32.gmra.mrb[0].mxu0 %v645
    %v1464 = vpop.f32.mrb[0].mxu0
    %v1465 = vadd.f32 0.0, %v1464
    %v1466 = vpop.f32.mrb[0].mxu0
    %v1467 = vadd.f32 0.0, %v1466
    %1468 = vdwg.mxu0
    %v1469 = vadd.f32 %v1383, %v1465
    %v1470 = vadd.f32 %v1384, %v1467
    %1471 = vrot.lane.b32.xlu0 %v816, 94
    %v1472 = vpop.permute.xlu0 %1471
    %1473 = vrot.lane.b32.xlu0 %v819, 94
    %v1474 = vpop.permute.xlu0 %1473
    %1475 = vrot.lane.b32.xlu0 %v817, 94
    %v1476 = vpop.permute.xlu0 %1475
    %v1477 = vsel %vm732, %v1472, %v1474
    %v1478 = vsel %vm732, %v1474, %v1476
    %v1479 = vsel %vm38, %v1477, 0
    %v1481 = vsel %vm38, %v1478, 0
    %1483 = vmatprep.subr.mxu0 %v1481
    %1484 = vmatpush1.msra.mxu0 %v1479
    %1485 = vmatprep.subr.mxu0 0.0
    %1486 = vmatpush1.msra.mxu0 0.0
    %1487 = vmatprep.subr.mxu0 0.0
    %1488 = vmatpush1.msra.mxu0 0.0
    %1489 = vmatprep.subr.mxu0 0.0
    %1490 = vmatpush1.msra.mxu0 0.0
    %1491 = vmatprep.subr.mxu0 0.0
    %1492 = vmatpush1.msra.mxu0 0.0
    %1493 = vmatprep.subr.mxu0 0.0
    %1494 = vmatpush1.msra.mxu0 0.0
    %1495 = vmatprep.subr.mxu0 0.0
    %1496 = vmatpush1.msra.mxu0 0.0
    %1497 = vmatprep.subr.mxu0 0.0
    %1498 = vmatpush1.msra.mxu0 0.0
    %1499 = vmatprep.subr.mxu0 0.0
    %1500 = vmatpush1.msra.mxu0 0.0
    %1501 = vmatprep.subr.mxu0 0.0
    %1502 = vmatpush1.msra.mxu0 0.0
    %1503 = vmatprep.subr.mxu0 0.0
    %1504 = vmatpush1.msra.mxu0 0.0
    %1505 = vmatprep.subr.mxu0 0.0
    %1506 = vmatpush1.msra.mxu0 0.0
    %1507 = vmatprep.subr.mxu0 0.0
    %1508 = vmatpush1.msra.mxu0 0.0
    %1509 = vmatprep.subr.mxu0 0.0
    %1510 = vmatpush1.msra.mxu0 0.0
    %1511 = vmatprep.subr.mxu0 0.0
    %1512 = vmatpush1.msra.mxu0 0.0
    %1513 = vmatprep.subr.mxu0 0.0
    %1514 = vmatpush1.msra.mxu0 0.0
    %1515 = vmatprep.subr.mxu0 0.0
    %1516 = vmatpush1.msra.mxu0 0.0
    %1517 = vmatprep.subr.mxu0 0.0
    %1518 = vmatpush1.msra.mxu0 0.0
    %1519 = vmatprep.subr.mxu0 0.0
    %1520 = vmatpush1.msra.mxu0 0.0
    %1521 = vmatprep.subr.mxu0 0.0
    %1522 = vmatpush1.msra.mxu0 0.0
    %1523 = vmatprep.subr.mxu0 0.0
    %1524 = vmatpush1.msra.mxu0 0.0
    %1525 = vmatprep.subr.mxu0 0.0
    %1526 = vmatpush1.msra.mxu0 0.0
    %1527 = vmatprep.subr.mxu0 0.0
    %1528 = vmatpush1.msra.mxu0 0.0
    %1529 = vmatprep.subr.mxu0 0.0
    %1530 = vmatpush1.msra.mxu0 0.0
    %1531 = vmatprep.subr.mxu0 0.0
    %1532 = vmatpush1.msra.mxu0 0.0
    %1533 = vmatprep.subr.mxu0 0.0
    %1534 = vmatpush1.msra.mxu0 0.0
    %1535 = vmatprep.subr.mxu0 0.0
    %1536 = vmatpush1.msra.mxu0 0.0
    %1537 = vmatprep.subr.mxu0 0.0
    %1538 = vmatpush1.msra.mxu0 0.0
    %1539 = vmatprep.subr.mxu0 0.0
    %1540 = vmatpush1.msra.mxu0 0.0
    %1541 = vmatprep.subr.mxu0 0.0
    %1542 = vmatpush1.msra.mxu0 0.0
    %1543 = vmatprep.subr.mxu0 0.0
    %1544 = vmatpush1.msra.mxu0 0.0
    %1545 = vmatprep.subr.mxu0 0.0
    %1546 = vmatpush1.msra.mxu0 0.0
    %1547 = vmatprep.mubr.f32.mxu0 0.0
    %1548 = vmatmul.mubr.f32.gmra.mrb[0].mxu0 %v736
    %v1549 = vpop.f32.mrb[0].mxu0
    %v1550 = vadd.f32 0.0, %v1549
    %v1551 = vpop.f32.mrb[0].mxu0
    %v1552 = vadd.f32 0.0, %v1551
    %1553 = vdwg.mxu0
    %v1554 = vadd.f32 %v1469, %v1550
    %v1555 = vadd.f32 %v1470, %v1552
    %v1556 = vld [vmem:[%s2] sm:$0x3]
    %v1558 = vlaneseq
    %v1559 = vshrl.u32 %v1558, 7
    %v1560 = vsub.s32 0, %v1559
    %v1561 = vrot.slane %v1556, %v1560
    %v1562 = vlaneseq
    %v1563 = vshrl.u32 %v1562, 7
    %v1564 = vsub.s32 1, %v1563
    %v1565 = vrot.slane %v1556, %v1564
    %v1568 = vmul.f32 %v813, %v1561
    %v1569 = vmul.f32 %v814, %v1565
    %v1570 = vsel %vm550, %v1569, 0.0
    %v1571 = vadd.f32 %v1568, %v1570
    %1572 = vadd.xlane.f32.xlu0 %v1571
    %v1573 = vpop.xlane.xlu0 %1572
    %v1574 = vadd.f32 %v1573, 0.0
    %v1575 = vmul.f32 %v813, %v1568
    %v1576 = vmul.f32 %v814, %v1569
    %v1577 = vsel %vm550, %v1576, 0.0
    %v1578 = vadd.f32 %v1575, %v1577
    %1579 = vadd.xlane.f32.xlu0 %v1578
    %v1580 = vpop.xlane.xlu0 %1579
    %v1581 = vadd.f32 %v1580, 0.0
    %v1582 = vmul.f32 %v1554, %v1561
    %v1583 = vmul.f32 %v1555, %v1565
    %v1584 = vsel %vm550, %v1583, 0.0
    %v1585 = vadd.f32 %v1582, %v1584
    %1586 = vadd.xlane.f32.xlu0 %v1585
    %v1587 = vpop.xlane.xlu0 %1586
    %v1588 = vadd.f32 %v1574, %v1587
    %v1589 = vmul.f32 %v1554, %v1582
    %v1590 = vmul.f32 %v1555, %v1583
    %v1591 = vsel %vm550, %v1590, 0.0
    %v1592 = vadd.f32 %v1589, %v1591
    %1593 = vadd.xlane.f32.xlu0 %v1592
    %v1594 = vpop.xlane.xlu0 %1593
    %v1595 = vadd.f32 %v1581, %v1594
    %v1596 = vmul.f32 %v1588, 0.0025510204
    %v1597 = vmul.f32 %v1595, 0.0025510204
    %v1598 = vmul.f32 %v1596, %v1596
    %v1599 = vsub.f32 %v1597, %v1598
    %v1600 = vld [vmem:[%s3] sm:$0xff]
    %v1601 = vadd.f32 %v1599, 1e-05
    %v1602 = vrsqrt.pop %v1601
    %v1603 = vmul.f32 %v1600, %v1602
    %v1604 = vld [vmem:[%s4] sm:$0xff]
    %v1605 = vmul.f32 %v1596, %v1603
    %v1606 = vsub.f32 %v1604, %v1605
    %1608 = vset.pattern.permute.xlu0 0
    %1609 = vperm.xlu0 %1608, %v1603
    %v1610 = vpop.permute.xlu0 %1609
    %v1612 = vmul.f32 %v813, %v1610
    %v1613 = vmul.f32 %v814, %v1610
    %1615 = vset.pattern.permute.xlu0 0
    %1616 = vperm.xlu0 %1615, %v1606
    %v1617 = vpop.permute.xlu0 %1616
    %v1619 = vadd.f32 %v1612, %v1617
    %v1620 = vadd.f32 %v1613, %v1617
    %v1621 = vmax.f32 %v1619, 0.0
    %v1622 = vmax.f32 %v1620, 0.0
    %1623 = vst [vmem:[#allocation2] sm:$0xff] %v1621
    %1624 = vst.msk [vmem:[#allocation2 + $0x8] sm:$0xff] %vm550, %v1622
    %v1625 = vmul.f32 %v1554, %v1610
    %v1626 = vmul.f32 %v1555, %v1610
    %v1627 = vadd.f32 %v1625, %v1617
    %v1628 = vadd.f32 %v1626, %v1617
    %v1629 = vmax.f32 %v1627, 0.0
    %v1630 = vmax.f32 %v1628, 0.0
    %s1631 = scalar_lea.vmem [#allocation2], 16
    %1632 = vst [vmem:[%s1631] sm:$0xff] %v1629
    %1633 = vst.msk [vmem:[%s1631 + $0x8] sm:$0xff] %vm550, %v1630
    // Predicated region
    $region22: #{tpu_custom_call.1} parent=1 // pred_check
      _
    $region23: #{tpu_custom_call.1} parent=1 // pred_check_branch
      %1635 = sbr.rel (0) target = $region25
    $region24: #{tpu_custom_call.1} parent=1 // pred_region
      %s1637 = ssub.s32 512, 512
      %1638 = vsyncadd [#allocation3], %s1637
      %s1639 = sshll.u32 [#allocation2], 4
      %s1640 = int_to_ptr.vmem [resolvable:$true] %s1639
      %1645 = dma.vmem_to_hbm [thread:$0]  %s1640, 512, %s5, [#allocation3], 256, 256, 16
    $region25: #{tpu_custom_call.1} parent=1 // pred_fallthru
      _
    // Predicated region
    $region26: #{tpu_custom_call.1} parent=1 // pred_check
      _
    $region27: #{tpu_custom_call.1} parent=1 // pred_check_branch
      %1647 = sbr.rel (0) target = $region29
    $region28: #{tpu_custom_call.1} parent=1 // pred_region
      %1648 = dma.done [#allocation3], 512
    $region29: #{tpu_custom_call.1} parent=1 // pred_fallthru
      _
    %1649 = vsyncpa [#allocation3], 1

</llo_original>
